<compile_context>
chip_gen: v7x
topology: tpu7x:2x2x1
jax: 0.10.0
libtpu: 0.0.40
codegen_flags: <defaults>
</compile_context>

<pallas_src>
from functools import partial

import jax
import jax.numpy as jnp
from jax import lax
from jax.experimental import pallas as pl
from jax.experimental.pallas import tpu as pltpu


def _self_attn_kernel(x_ref, xt_ref, wqT_ref, bq_ref, wk_ref, bk_ref,
                      wvT_ref, bv_ref, gamma_ref, out_ref, att_ref,
                      *, tq, n_valid, n_pad):
    x = x_ref[0]                                        # (C, N_pad)
    xt = xt_ref[0]                                      # (N_pad, C)
    q0 = pl.multiple_of(pl.program_id(1) * tq, tq)
    xt_tile = xt_ref[0, pl.ds(q0, tq), :]               # (TQ, C) query rows

    # 1x1 convs == channel matmuls (MXU), all in plain (M,K)@(K,N) form.
    q_t = jnp.dot(xt_tile, wqT_ref[...],
                  preferred_element_type=jnp.float32) + bq_ref[...]      # (TQ, C8)
    k = jnp.dot(wk_ref[...], x,
                preferred_element_type=jnp.float32) + bk_ref[...]        # (C8, N_pad)
    v_t = jnp.dot(xt, wvT_ref[...],
                  preferred_element_type=jnp.float32) + bv_ref[...]      # (N_pad, C)

    # energy[i, j] = sum_o q_t[i, o] * k[o, j]  -- plain matmul, no transposes.
    energy = jnp.dot(q_t, k, preferred_element_type=jnp.float32)         # (TQ, N_pad)
    if n_pad != n_valid:                                # static branch (padding only)
        col = lax.broadcasted_iota(jnp.int32, (tq, n_pad), 1)
        energy = jnp.where(col < n_valid, energy, -1e30)

    # softmax over keys (lane axis).
    m = jnp.max(energy, axis=-1, keepdims=True)
    p = jnp.exp(energy - m)
    l = jnp.sum(p, axis=-1, keepdims=True)
    att = p * pl.reciprocal(l, approx=False)                             # (TQ, N_pad)

    # out_t[i, c] = sum_j att[i, j] * v_t[j, c]  -- full-depth K = N MXU matmul.
    out_t = jnp.dot(att, v_t, preferred_element_type=jnp.float32)        # (TQ, C)

    gamma = gamma_ref[0]                                 # scalar from SMEM
    x_tile = x_ref[0, :, pl.ds(q0, tq)]                  # (C, TQ) residual
    out_ref[0] = gamma * out_t.T + x_tile                # only transpose: (TQ,C)->(C,TQ)
    att_ref[0] = att


def _pick_tq(n_pad):
    # Largest multiple of 128 that divides n_pad and is <= 512 (bounds VMEM per step).
    for t in (512, 384, 256, 128):
        if n_pad % t == 0:
            return t
    return n_pad


def self_attn(x_nchw, wq, bq, wk, bk, wv, bv, gamma):
    """x_nchw: (B, C, W, H) float32.  Returns (out (B,C,W,H), attention (B,N,N))."""
    B, C, W, H = x_nchw.shape
    N = W * H
    C8 = wq.shape[0]
    n_pad = ((N + 127) // 128) * 128
    tq = _pick_tq(n_pad)
    num_q = n_pad // tq

    x_flat = x_nchw.reshape(B, C, N).astype(jnp.float32)
    if n_pad != N:
        x_flat = jnp.pad(x_flat, ((0, 0), (0, 0), (0, n_pad - N)))
    xt_flat = jnp.transpose(x_flat, (0, 2, 1))           # (B, N_pad, C) via XLA

    wqT = wq.T.astype(jnp.float32)                        # (C, C8)
    wvT = wv.T.astype(jnp.float32)                        # (C, C)
    wk_f = wk.astype(jnp.float32)                         # (C8, C)
    bq_r = bq.reshape(1, C8).astype(jnp.float32)
    bk_c = bk.reshape(C8, 1).astype(jnp.float32)
    bv_r = bv.reshape(1, C).astype(jnp.float32)
    gamma_s = gamma.reshape(1).astype(jnp.float32)

    kernel = partial(_self_attn_kernel, tq=tq, n_valid=N, n_pad=n_pad)

    out_flat, att = pl.pallas_call(
        kernel,
        out_shape=(
            jax.ShapeDtypeStruct((B, C, n_pad), jnp.float32),
            jax.ShapeDtypeStruct((B, n_pad, n_pad), jnp.float32),
        ),
        grid_spec=pltpu.PrefetchScalarGridSpec(
            num_scalar_prefetch=0,
            grid=(B, num_q),
            in_specs=[
                pl.BlockSpec((1, C, n_pad), lambda b, q: (b, 0, 0)),   # x   (C, N)
                pl.BlockSpec((1, n_pad, C), lambda b, q: (b, 0, 0)),   # x^T (N, C)
                pl.BlockSpec((C, C8), lambda b, q: (0, 0)),            # Wq^T
                pl.BlockSpec((1, C8), lambda b, q: (0, 0)),            # bq (row)
                pl.BlockSpec((C8, C), lambda b, q: (0, 0)),            # Wk
                pl.BlockSpec((C8, 1), lambda b, q: (0, 0)),            # bk (col)
                pl.BlockSpec((C, C), lambda b, q: (0, 0)),             # Wv^T
                pl.BlockSpec((1, C), lambda b, q: (0, 0)),             # bv (row)
                pl.BlockSpec(memory_space=pltpu.MemorySpace.SMEM),     # gamma scalar
            ],
            out_specs=[
                pl.BlockSpec((1, C, tq), lambda b, q: (b, 0, q)),      # out (lane-dense)
                pl.BlockSpec((1, tq, n_pad), lambda b, q: (b, q, 0)),  # attention
            ],
        ),
        compiler_params=pltpu.CompilerParams(
            dimension_semantics=("parallel", "parallel")),
    )(x_flat, xt_flat, wqT, bq_r, wk_f, bk_c, wvT, bv_r, gamma_s)

    out = out_flat[:, :, :N].reshape(B, C, W, H)
    att = att[:, :N, :N]
    return out, att


def self_attn_reference(x_nchw, wq, bq, wk, bk, wv, bv, gamma):
    """Pure-JAX reference matching the PyTorch forward."""
    B, C, W, H = x_nchw.shape
    N = W * H
    xf = x_nchw.reshape(B, C, N)
    hi = jax.lax.Precision.HIGHEST
    q = jnp.einsum('oc,bcn->bon', wq, xf, precision=hi) + bq[None, :, None]   # (B, C8, N)
    k = jnp.einsum('oc,bcn->bon', wk, xf, precision=hi) + bk[None, :, None]   # (B, C8, N)
    v = jnp.einsum('oc,bcn->bon', wv, xf, precision=hi) + bv[None, :, None]   # (B, C,  N)
    energy = jnp.einsum('bci,bcj->bij', q, k, precision=hi)                   # (B, N, N)
    att = jax.nn.softmax(energy, axis=-1)
    out = jnp.einsum('bcj,bij->bci', v, att, precision=hi)                    # (B, C, N)
    out = gamma[0] * out + xf
    return out.reshape(B, C, W, H), att


if __name__ == "__main__":
    B, C, W, H = 2, 32, 16, 16          # in_dim=32 so in_dim//8 = 4; N = 256
    C8 = C // 8

    key = jax.random.PRNGKey(0)
    kx, kq, kbq, kk, kbk, kv, kbv = jax.random.split(key, 7)

    x = jax.random.normal(kx, (B, C, W, H), dtype=jnp.float32)
    wq = jax.random.normal(kq, (C8, C), dtype=jnp.float32) * 0.1
    bq = jax.random.normal(kbq, (C8,), dtype=jnp.float32) * 0.1
    wk = jax.random.normal(kk, (C8, C), dtype=jnp.float32) * 0.1
    bk = jax.random.normal(kbk, (C8,), dtype=jnp.float32) * 0.1
    wv = jax.random.normal(kv, (C, C), dtype=jnp.float32) * 0.1
    bv = jax.random.normal(kbv, (C,), dtype=jnp.float32) * 0.1
    # nn.Parameter(torch.zeros(1)) in the module; nonzero here so the attention path
    # actually contributes to the output being checked.
    gamma = jnp.array([0.5], dtype=jnp.float32)

    out, att = self_attn(x, wq, bq, wk, bk, wv, bv, gamma)
    out = jax.block_until_ready(out)
    att = jax.block_until_ready(att)

    out_ref, att_ref = self_attn_reference(x, wq, bq, wk, bk, wv, bv, gamma)
    assert out.shape == (B, C, W, H) and att.shape == (B, W * H, W * H)
    assert jnp.allclose(out, out_ref, atol=1e-4, rtol=1e-4)
    assert jnp.allclose(att, att_ref, atol=1e-5, rtol=1e-4)

    print("KERNEL_OK")
</pallas_src>

<mosaic_0001>
module attributes {stable_mosaic.version = 11 : i64} {
  func.func @_self_attn_kernel(%arg0: i32, %arg1: i32, %arg2: memref<1x32x256xf32, #tpu.memory_space<vmem>>, %arg3: memref<1x256x32xf32, #tpu.memory_space<vmem>>, %arg4: memref<32x4xf32, #tpu.memory_space<vmem>>, %arg5: memref<1x4xf32, #tpu.memory_space<vmem>>, %arg6: memref<4x32xf32, #tpu.memory_space<vmem>>, %arg7: memref<4x1xf32, #tpu.memory_space<vmem>>, %arg8: memref<32x32xf32, #tpu.memory_space<vmem>>, %arg9: memref<1x32xf32, #tpu.memory_space<vmem>>, %arg10: memref<1xf32, #tpu.memory_space<smem>>, %arg11: memref<1x32x256xf32, #tpu.memory_space<vmem>>, %arg12: memref<1x256x256xf32, #tpu.memory_space<vmem>>) attributes {dimension_semantics = [#tpu.dimension_semantics<parallel>, #tpu.dimension_semantics<parallel>], iteration_bounds = array<i64: 2, 1>, scalar_prefetch = 0 : i64, scratch_operands = 0 : i64, tpu.core_type = #tpu.core_type<tc>, window_params = [{transform_indices = @transform_0, window_bounds = array<i64: 1, 32, 256>}, {transform_indices = @transform_1, window_bounds = array<i64: 1, 256, 32>}, {pipeline_mode = #tpu.pipeline_mode<synchronous>, transform_indices = @transform_2, window_bounds = array<i64: 32, 4>}, {pipeline_mode = #tpu.pipeline_mode<synchronous>, transform_indices = @transform_3, window_bounds = array<i64: 1, 4>}, {pipeline_mode = #tpu.pipeline_mode<synchronous>, transform_indices = @transform_4, window_bounds = array<i64: 4, 32>}, {pipeline_mode = #tpu.pipeline_mode<synchronous>, transform_indices = @transform_5, window_bounds = array<i64: 4, 1>}, {pipeline_mode = #tpu.pipeline_mode<synchronous>, transform_indices = @transform_6, window_bounds = array<i64: 32, 32>}, {pipeline_mode = #tpu.pipeline_mode<synchronous>, transform_indices = @transform_7, window_bounds = array<i64: 1, 32>}, {transform_indices = @transform_8, window_bounds = array<i64: 1>}, {transform_indices = @transform_9, window_bounds = array<i64: 1, 32, 256>}, {transform_indices = @transform_10, window_bounds = array<i64: 1, 256, 256>}]} {
    %c0 = arith.constant 0 : index
    %c0_0 = arith.constant 0 : index
    %c0_1 = arith.constant 0 : index
    %0 = vector.load %arg2[%c0, %c0_0, %c0_1] : memref<1x32x256xf32, #tpu.memory_space<vmem>>, vector<1x32x256xf32>
    %1 = vector.shape_cast %0 : vector<1x32x256xf32> to vector<32x256xf32>
    %c0_2 = arith.constant 0 : index
    %c0_3 = arith.constant 0 : index
    %c0_4 = arith.constant 0 : index
    %2 = vector.load %arg3[%c0_2, %c0_3, %c0_4] : memref<1x256x32xf32, #tpu.memory_space<vmem>>, vector<1x256x32xf32>
    %3 = vector.shape_cast %2 : vector<1x256x32xf32> to vector<256x32xf32>
    %c256_i32 = arith.constant 256 : i32
    %4 = arith.muli %arg1, %c256_i32 : i32
    %5 = tpu.assume_multiple %4, 256 : i32
    %c0_5 = arith.constant 0 : index
    %6 = arith.index_cast %5 : i32 to index
    %c0_6 = arith.constant 0 : index
    %7 = vector.load %arg3[%c0_5, %6, %c0_6] : memref<1x256x32xf32, #tpu.memory_space<vmem>>, vector<1x256x32xf32>
    %8 = vector.shape_cast %7 : vector<1x256x32xf32> to vector<256x32xf32>
    %c0_7 = arith.constant 0 : index
    %c0_8 = arith.constant 0 : index
    %9 = vector.load %arg4[%c0_7, %c0_8] : memref<32x4xf32, #tpu.memory_space<vmem>>, vector<32x4xf32>
    %cst = arith.constant dense<0.000000e+00> : vector<256x4xf32>
    %10 = tpu.matmul %8, %9, %cst {dimension_numbers = #tpu.dot_dimension_numbers<[1], [0], [0], [1], [0, 0, 1, 1], [], []>} : vector<256x32xf32>, vector<32x4xf32>, vector<256x4xf32> -> vector<256x4xf32>
    %c0_9 = arith.constant 0 : index
    %c0_10 = arith.constant 0 : index
    %11 = vector.load %arg5[%c0_9, %c0_10] : memref<1x4xf32, #tpu.memory_space<vmem>>, vector<1x4xf32>
    %12 = vector.broadcast %11 : vector<1x4xf32> to vector<256x4xf32>
    %13 = arith.addf %10, %12 : vector<256x4xf32>
    %c0_11 = arith.constant 0 : index
    %c0_12 = arith.constant 0 : index
    %14 = vector.load %arg6[%c0_11, %c0_12] : memref<4x32xf32, #tpu.memory_space<vmem>>, vector<4x32xf32>
    %cst_13 = arith.constant dense<0.000000e+00> : vector<4x256xf32>
    %15 = tpu.matmul %14, %1, %cst_13 {dimension_numbers = #tpu.dot_dimension_numbers<[1], [0], [0], [1], [0, 0, 1, 1], [], []>} : vector<4x32xf32>, vector<32x256xf32>, vector<4x256xf32> -> vector<4x256xf32>
    %c0_14 = arith.constant 0 : index
    %c0_15 = arith.constant 0 : index
    %16 = vector.load %arg7[%c0_14, %c0_15] : memref<4x1xf32, #tpu.memory_space<vmem>>, vector<4x1xf32>
    %17 = vector.broadcast %16 : vector<4x1xf32> to vector<4x256xf32>
    %18 = arith.addf %15, %17 : vector<4x256xf32>
    %c0_16 = arith.constant 0 : index
    %c0_17 = arith.constant 0 : index
    %19 = vector.load %arg8[%c0_16, %c0_17] : memref<32x32xf32, #tpu.memory_space<vmem>>, vector<32x32xf32>
    %cst_18 = arith.constant dense<0.000000e+00> : vector<256x32xf32>
    %20 = tpu.matmul %3, %19, %cst_18 {dimension_numbers = #tpu.dot_dimension_numbers<[1], [0], [0], [1], [0, 0, 1, 1], [], []>} : vector<256x32xf32>, vector<32x32xf32>, vector<256x32xf32> -> vector<256x32xf32>
    %c0_19 = arith.constant 0 : index
    %c0_20 = arith.constant 0 : index
    %21 = vector.load %arg9[%c0_19, %c0_20] : memref<1x32xf32, #tpu.memory_space<vmem>>, vector<1x32xf32>
    %22 = vector.broadcast %21 : vector<1x32xf32> to vector<256x32xf32>
    %23 = arith.addf %20, %22 : vector<256x32xf32>
    %cst_21 = arith.constant dense<0.000000e+00> : vector<256x256xf32>
    %24 = tpu.matmul %13, %18, %cst_21 {dimension_numbers = #tpu.dot_dimension_numbers<[1], [0], [0], [1], [0, 0, 1, 1], [], []>} : vector<256x4xf32>, vector<4x256xf32>, vector<256x256xf32> -> vector<256x256xf32>
    %cst_22 = arith.constant dense<0xFF800000> : vector<256xf32>
    %25 = vector.multi_reduction <maximumf>, %24, %cst_22 [1] : vector<256x256xf32> to vector<256xf32>
    %26 = vector.shape_cast %25 : vector<256xf32> to vector<256x1xf32>
    %27 = vector.broadcast %26 : vector<256x1xf32> to vector<256x256xf32>
    %28 = arith.subf %24, %27 : vector<256x256xf32>
    %29 = math.exp %28 : vector<256x256xf32>
    %cst_23 = arith.constant dense<0.000000e+00> : vector<256xf32>
    %30 = vector.multi_reduction <add>, %29, %cst_23 [1] : vector<256x256xf32> to vector<256xf32>
    %31 = vector.shape_cast %30 : vector<256xf32> to vector<256x1xf32>
    %32 = tpu.reciprocal %31 : vector<256x1xf32> -> vector<256x1xf32>
    %33 = vector.broadcast %32 : vector<256x1xf32> to vector<256x256xf32>
    %34 = arith.mulf %29, %33 : vector<256x256xf32>
    %cst_24 = arith.constant dense<0.000000e+00> : vector<256x32xf32>
    %35 = tpu.matmul %34, %23, %cst_24 {dimension_numbers = #tpu.dot_dimension_numbers<[1], [0], [0], [1], [0, 0, 1, 1], [], []>} : vector<256x256xf32>, vector<256x32xf32>, vector<256x32xf32> -> vector<256x32xf32>
    %c0_25 = arith.constant 0 : index
    %36 = memref.load %arg10[%c0_25] : memref<1xf32, #tpu.memory_space<smem>>
    %c0_26 = arith.constant 0 : index
    %c0_27 = arith.constant 0 : index
    %37 = arith.index_cast %5 : i32 to index
    %38 = vector.load %arg2[%c0_26, %c0_27, %37] : memref<1x32x256xf32, #tpu.memory_space<vmem>>, vector<1x32x256xf32>
    %39 = vector.shape_cast %38 : vector<1x32x256xf32> to vector<32x256xf32>
    %40 = tpu.transpose %35, [1, 0] : vector<256x32xf32> -> vector<32x256xf32>
    %41 = vector.broadcast %36 : f32 to vector<32x256xf32>
    %42 = arith.mulf %41, %40 : vector<32x256xf32>
    %43 = arith.addf %42, %39 : vector<32x256xf32>
    %c0_28 = arith.constant 0 : index
    %c0_29 = arith.constant 0 : index
    %c0_30 = arith.constant 0 : index
    %44 = vector.load %arg11[%c0_28, %c0_29, %c0_30] : memref<1x32x256xf32, #tpu.memory_space<vmem>>, vector<1x32x256xf32>
    %45 = vector.shape_cast %44 : vector<1x32x256xf32> to vector<32x256xf32>
    %46 = vector.shape_cast %43 : vector<32x256xf32> to vector<1x32x256xf32>
    tpu.vector_store %arg11[%c0_28, %c0_29, %c0_30], %46 {strides = array<i32>} : memref<1x32x256xf32, #tpu.memory_space<vmem>>, vector<1x32x256xf32>,
    %c0_31 = arith.constant 0 : index
    %c0_32 = arith.constant 0 : index
    %c0_33 = arith.constant 0 : index
    %47 = vector.load %arg12[%c0_31, %c0_32, %c0_33] : memref<1x256x256xf32, #tpu.memory_space<vmem>>, vector<1x256x256xf32>
    %48 = vector.shape_cast %47 : vector<1x256x256xf32> to vector<256x256xf32>
    %49 = vector.shape_cast %34 : vector<256x256xf32> to vector<1x256x256xf32>
    tpu.vector_store %arg12[%c0_31, %c0_32, %c0_33], %49 {strides = array<i32>} : memref<1x256x256xf32, #tpu.memory_space<vmem>>, vector<1x256x256xf32>,
    return
  }
  func.func @transform_0(%arg0: i32, %arg1: i32) -> (i32, i32, i32) {
    %c0_i32 = arith.constant 0 : i32
    %c0_i32_0 = arith.constant 0 : i32
    %c0_i32_1 = arith.constant 0 : i32
    return %arg0, %c0_i32, %c0_i32_0 : i32, i32, i32
  }
  func.func @transform_1(%arg0: i32, %arg1: i32) -> (i32, i32, i32) {
    %c0_i32 = arith.constant 0 : i32
    %c0_i32_0 = arith.constant 0 : i32
    %c0_i32_1 = arith.constant 0 : i32
    return %arg0, %c0_i32, %c0_i32_0 : i32, i32, i32
  }
  func.func @transform_2(%arg0: i32, %arg1: i32) -> (i32, i32) {
    %c0_i32 = arith.constant 0 : i32
    %c0_i32_0 = arith.constant 0 : i32
    %c0_i32_1 = arith.constant 0 : i32
    return %c0_i32, %c0_i32_0 : i32, i32
  }
  func.func @transform_3(%arg0: i32, %arg1: i32) -> (i32, i32) {
    %c0_i32 = arith.constant 0 : i32
    %c0_i32_0 = arith.constant 0 : i32
    %c0_i32_1 = arith.constant 0 : i32
    return %c0_i32, %c0_i32_0 : i32, i32
  }
  func.func @transform_4(%arg0: i32, %arg1: i32) -> (i32, i32) {
    %c0_i32 = arith.constant 0 : i32
    %c0_i32_0 = arith.constant 0 : i32
    %c0_i32_1 = arith.constant 0 : i32
    return %c0_i32, %c0_i32_0 : i32, i32
  }
  func.func @transform_5(%arg0: i32, %arg1: i32) -> (i32, i32) {
    %c0_i32 = arith.constant 0 : i32
    %c0_i32_0 = arith.constant 0 : i32
    %c0_i32_1 = arith.constant 0 : i32
    return %c0_i32, %c0_i32_0 : i32, i32
  }
  func.func @transform_6(%arg0: i32, %arg1: i32) -> (i32, i32) {
    %c0_i32 = arith.constant 0 : i32
    %c0_i32_0 = arith.constant 0 : i32
    %c0_i32_1 = arith.constant 0 : i32
    return %c0_i32, %c0_i32_0 : i32, i32
  }
  func.func @transform_7(%arg0: i32, %arg1: i32) -> (i32, i32) {
    %c0_i32 = arith.constant 0 : i32
    %c0_i32_0 = arith.constant 0 : i32
    %c0_i32_1 = arith.constant 0 : i32
    return %c0_i32, %c0_i32_0 : i32, i32
  }
  func.func @transform_8(%arg0: i32, %arg1: i32) -> i32 {
    %c0_i32 = arith.constant 0 : i32
    %c0_i32_0 = arith.constant 0 : i32
    return %c0_i32 : i32
  }
  func.func @transform_9(%arg0: i32, %arg1: i32) -> (i32, i32, i32) {
    %c0_i32 = arith.constant 0 : i32
    %c0_i32_0 = arith.constant 0 : i32
    return %arg0, %c0_i32, %arg1 : i32, i32, i32
  }
  func.func @transform_10(%arg0: i32, %arg1: i32) -> (i32, i32, i32) {
    %c0_i32 = arith.constant 0 : i32
    %c0_i32_0 = arith.constant 0 : i32
    return %arg0, %arg1, %c0_i32 : i32, i32, i32
  }
}

</mosaic_0001>

<llo_original>
// kernel: tpu_custom_call.1
$region0: #{tpu_custom_call.1}
  #allocation0 [shape = 'u32[]', space=smem, size = 0x4, offset = 0x4, fixed_abs, tag = 'smem constant byte address 0x4 - core index']
  #allocation1 [shape = 'u32[144,128]{1,0:T(1,128)}', space=vmem, size = 0x12000, scoped, tag = 'internal scratch']
  #allocation2 [shape = 'f32[1]{0:T(128)S(6)}', space=smem, size = 0x200, scoped, tag = 'scoped memory for tpu_custom_call.1']
  %s0 = inlined_call_operand.vmem [shape: f32[2,32,256], index: 0, kind: input, shape index: {}]
  %s1 = inlined_call_operand.vmem [shape: f32[2,256,32], index: 1, kind: input, shape index: {}]
  %s2 = inlined_call_operand.vmem [shape: f32[32,4], index: 2, kind: input, shape index: {}]
  %s3 = inlined_call_operand.vmem [shape: f32[1,4], index: 3, kind: input, shape index: {}]
  %s4 = inlined_call_operand.vmem [shape: f32[4,32], index: 4, kind: input, shape index: {}]
  %s5 = inlined_call_operand.vmem [shape: f32[4,1], index: 5, kind: input, shape index: {}]
  %s6 = inlined_call_operand.vmem [shape: f32[32,32], index: 6, kind: input, shape index: {}]
  %s7 = inlined_call_operand.vmem [shape: f32[1,32], index: 7, kind: input, shape index: {}]
  %s8 = inlined_call_operand.<no memory space> [shape: f32[1], index: 8, kind: input, shape index: {}]
  %s9 = inlined_call_operand.hbm [shape: f32[2,32,256], index: 9, kind: output, shape index: {0}]
  %s10 = inlined_call_operand.hbm [shape: f32[2,256,256], index: 10, kind: output, shape index: {1}]
  %11 = xla_tuple %s9, %s10
  %s12 = sld [smem:[#allocation0]]
  $region77: #{tpu_custom_call.1} parent=0
    _
  %s14 = ssub.s32 1, %s12
  %s15 = scalar_select 0, %s14, %s12
  %16 = sst [smem:[#allocation2]] %s8
  $region1: #{tpu_custom_call.1} parent=0
    #allocation3 [shape = 'u8[65536]{0}', space=vmem, size = 0x10000, scoped, tag = 'output window, operand 0']
    #allocation4 [shape = 's32[2]{0}', space=sflag, size = 0x8, scoped, tag = 'scoped memory for tpu_custom_call.1']
    #allocation5 [shape = 'u8[524288]{0}', space=vmem, size = 0x80000, scoped, tag = 'output window, operand 1']
    #allocation6 [shape = 's32[2]{0}', space=sflag, size = 0x8, scoped, tag = 'scoped memory for tpu_custom_call.1']
    %17 = vsyncpa [#allocation4], 0
    %s18 = scalar_lea.sflag [#allocation4], 1
    %19 = vsyncpa %s18, 0
    %20 = vsyncpa [#allocation6], 0
    %s21 = scalar_lea.sflag [#allocation6], 1
    %22 = vsyncpa %s21, 0
    loop: start=0, step=1, limit=4
    $region2: #{tpu_custom_call.1} parent=1 // loop_pre_header
      _
    $region3: #{tpu_custom_call.1} parent=1 // loop_header
      %s24 = sphi 0, %s28
      %p25 = scmp.ge.s32.totalorder %s24, 4
      %s31 = sphi 0, %s43
      %s32 = sphi 0, %s39
      %s33 = sphi 0, %s31
      %s34 = sphi 0, %s32
      %s35 = sphi 0, %s33
      %s36 = sphi 0, %s34
      %s46 = sphi 0, %s48
      %s49 = sphi 0, %s46
      %s50 = sphi 0, %s49
      %s66 = sphi 0, %s50
      %s72 = sphi 0, %s74
      %s75 = sphi 0, %s72
      %s76 = sphi 0, %s75
      %s92 = sphi 0, %s76
      %s96 = sphi 0, %s96
      %s98 = sphi 0, %s96
      %s99 = sphi 0, %s98
      %s113 = sphi 0, %s99
      %s117 = sphi 0, %s117
      %s119 = sphi 0, %s117
      %s120 = sphi 0, %s119
      %s134 = sphi 0, %s120
      %s138 = sphi 0, %s138
      %s140 = sphi 0, %s138
      %s141 = sphi 0, %s140
      %s155 = sphi 0, %s141
      %s159 = sphi 0, %s159
      %s161 = sphi 0, %s159
      %s162 = sphi 0, %s161
      %s176 = sphi 0, %s162
      %s180 = sphi 0, %s180
      %s182 = sphi 0, %s180
      %s183 = sphi 0, %s182
      %s197 = sphi 0, %s183
      %s201 = sphi 0, %s201
      %s203 = sphi 0, %s201
      %s204 = sphi 0, %s203
      %s218 = sphi 0, %s204
      %s222 = sphi 0, %s222
      %s224 = sphi 0, %s222
      %s225 = sphi 0, %s224
      %s239 = sphi 0, %s225
      %s247 = sphi 0, %s249
      %s250 = sphi 0, %s247
      %s251 = sphi 0, %s250
      %s267 = sphi 0, %s251
      %s275 = sphi 0, %s277
      %s278 = sphi 0, %s275
      %s279 = sphi 0, %s278
      %s295 = sphi 0, %s279
    $region4: #{tpu_custom_call.1} parent=1 // loop_header_branch
      %27 = sbr.rel (%p25) target = $region8
    $region5: #{tpu_custom_call.1} parent=1 // loop_body
      %s29 = ssub.s32 %s24, 1
      %s30 = ssub.s32 %s24, 2
      %s37 = sadd.s32 1, %s32
      %p38 = scmp.ge.s32.totalorder %s37, 1
      %s39 = scalar_select %p38, 0, %s37
      %s40 = sadd.s32 1, %s31
      %s41 = scalar_select %p38, %s40, %s31
      %p42 = scmp.ge.s32.totalorder %s41, 2
      %s43 = scalar_select %p42, 0, %s41
      %s44 = ssub.s32 %s31, %s43
      %p45 = scmp.eq.s32.totalorder %s44, 0
      %s47 = sadd.s32 %s46, 1
      %s48 = scalar_select %p45, %s46, %s47
      %p51 = pneg %p45
      %p52 = scmp.eq.s32.totalorder %s24, 1
      %p53 = por %p51, %p52
      %p54 = scmp.ne.s32.totalorder %s46, %s49
      %p55 = scmp.eq.s32.totalorder %s24, 0
      %p56 = por %p54, %p55
      %p57 = scmp.ne.s32.totalorder %s46, %s49
      %p58 = scmp.eq.s32.totalorder %s29, 1
      %p59 = por %p57, %p58
      %p60 = scmp.ne.s32.totalorder %s49, %s50
      %p61 = scmp.eq.s32.totalorder %s29, 0
      %p62 = por %p60, %p61
      %p63 = scmp.ne.s32.totalorder %s49, %s50
      %p64 = scmp.eq.s32.totalorder %s30, 1
      %p65 = por %p63, %p64
      %p67 = scmp.ne.s32.totalorder %s50, %s66
      %p68 = scmp.eq.s32.totalorder %s30, 0
      %p69 = por %p67, %p68
      %s70 = ssub.s32 %s31, %s43
      %p71 = scmp.eq.s32.totalorder %s70, 0
      %s73 = sadd.s32 %s72, 1
      %s74 = scalar_select %p71, %s72, %s73
      %p77 = pneg %p71
      %p78 = scmp.eq.s32.totalorder %s24, 1
      %p79 = por %p77, %p78
      %p80 = scmp.ne.s32.totalorder %s72, %s75
      %p81 = scmp.eq.s32.totalorder %s24, 0
      %p82 = por %p80, %p81
      %p83 = scmp.ne.s32.totalorder %s72, %s75
      %p84 = scmp.eq.s32.totalorder %s29, 1
      %p85 = por %p83, %p84
      %p86 = scmp.ne.s32.totalorder %s75, %s76
      %p87 = scmp.eq.s32.totalorder %s29, 0
      %p88 = por %p86, %p87
      %p89 = scmp.ne.s32.totalorder %s75, %s76
      %p90 = scmp.eq.s32.totalorder %s30, 1
      %p91 = por %p89, %p90
      %p93 = scmp.ne.s32.totalorder %s76, %s92
      %p94 = scmp.eq.s32.totalorder %s30, 0
      %p95 = por %p93, %p94
      %s97 = sadd.s32 %s96, 1
      %p100 = scmp.eq.s32.totalorder %s24, 1
      %p101 = scmp.ne.s32.totalorder %s96, %s98
      %p102 = scmp.eq.s32.totalorder %s24, 0
      %p103 = por %p101, %p102
      %p104 = scmp.ne.s32.totalorder %s96, %s98
      %p105 = scmp.eq.s32.totalorder %s29, 1
      %p106 = por %p104, %p105
      %p107 = scmp.ne.s32.totalorder %s98, %s99
      %p108 = scmp.eq.s32.totalorder %s29, 0
      %p109 = por %p107, %p108
      %p110 = scmp.ne.s32.totalorder %s98, %s99
      %p111 = scmp.eq.s32.totalorder %s30, 1
      %p112 = por %p110, %p111
      %p114 = scmp.ne.s32.totalorder %s99, %s113
      %p115 = scmp.eq.s32.totalorder %s30, 0
      %p116 = por %p114, %p115
      %s118 = sadd.s32 %s117, 1
      %p121 = scmp.eq.s32.totalorder %s24, 1
      %p122 = scmp.ne.s32.totalorder %s117, %s119
      %p123 = scmp.eq.s32.totalorder %s24, 0
      %p124 = por %p122, %p123
      %p125 = scmp.ne.s32.totalorder %s117, %s119
      %p126 = scmp.eq.s32.totalorder %s29, 1
      %p127 = por %p125, %p126
      %p128 = scmp.ne.s32.totalorder %s119, %s120
      %p129 = scmp.eq.s32.totalorder %s29, 0
      %p130 = por %p128, %p129
      %p131 = scmp.ne.s32.totalorder %s119, %s120
      %p132 = scmp.eq.s32.totalorder %s30, 1
      %p133 = por %p131, %p132
      %p135 = scmp.ne.s32.totalorder %s120, %s134
      %p136 = scmp.eq.s32.totalorder %s30, 0
      %p137 = por %p135, %p136
      %s139 = sadd.s32 %s138, 1
      %p142 = scmp.eq.s32.totalorder %s24, 1
      %p143 = scmp.ne.s32.totalorder %s138, %s140
      %p144 = scmp.eq.s32.totalorder %s24, 0
      %p145 = por %p143, %p144
      %p146 = scmp.ne.s32.totalorder %s138, %s140
      %p147 = scmp.eq.s32.totalorder %s29, 1
      %p148 = por %p146, %p147
      %p149 = scmp.ne.s32.totalorder %s140, %s141
      %p150 = scmp.eq.s32.totalorder %s29, 0
      %p151 = por %p149, %p150
      %p152 = scmp.ne.s32.totalorder %s140, %s141
      %p153 = scmp.eq.s32.totalorder %s30, 1
      %p154 = por %p152, %p153
      %p156 = scmp.ne.s32.totalorder %s141, %s155
      %p157 = scmp.eq.s32.totalorder %s30, 0
      %p158 = por %p156, %p157
      %s160 = sadd.s32 %s159, 1
      %p163 = scmp.eq.s32.totalorder %s24, 1
      %p164 = scmp.ne.s32.totalorder %s159, %s161
      %p165 = scmp.eq.s32.totalorder %s24, 0
      %p166 = por %p164, %p165
      %p167 = scmp.ne.s32.totalorder %s159, %s161
      %p168 = scmp.eq.s32.totalorder %s29, 1
      %p169 = por %p167, %p168
      %p170 = scmp.ne.s32.totalorder %s161, %s162
      %p171 = scmp.eq.s32.totalorder %s29, 0
      %p172 = por %p170, %p171
      %p173 = scmp.ne.s32.totalorder %s161, %s162
      %p174 = scmp.eq.s32.totalorder %s30, 1
      %p175 = por %p173, %p174
      %p177 = scmp.ne.s32.totalorder %s162, %s176
      %p178 = scmp.eq.s32.totalorder %s30, 0
      %p179 = por %p177, %p178
      %s181 = sadd.s32 %s180, 1
      %p184 = scmp.eq.s32.totalorder %s24, 1
      %p185 = scmp.ne.s32.totalorder %s180, %s182
      %p186 = scmp.eq.s32.totalorder %s24, 0
      %p187 = por %p185, %p186
      %p188 = scmp.ne.s32.totalorder %s180, %s182
      %p189 = scmp.eq.s32.totalorder %s29, 1
      %p190 = por %p188, %p189
      %p191 = scmp.ne.s32.totalorder %s182, %s183
      %p192 = scmp.eq.s32.totalorder %s29, 0
      %p193 = por %p191, %p192
      %p194 = scmp.ne.s32.totalorder %s182, %s183
      %p195 = scmp.eq.s32.totalorder %s30, 1
      %p196 = por %p194, %p195
      %p198 = scmp.ne.s32.totalorder %s183, %s197
      %p199 = scmp.eq.s32.totalorder %s30, 0
      %p200 = por %p198, %p199
      %s202 = sadd.s32 %s201, 1
      %p205 = scmp.eq.s32.totalorder %s24, 1
      %p206 = scmp.ne.s32.totalorder %s201, %s203
      %p207 = scmp.eq.s32.totalorder %s24, 0
      %p208 = por %p206, %p207
      %p209 = scmp.ne.s32.totalorder %s201, %s203
      %p210 = scmp.eq.s32.totalorder %s29, 1
      %p211 = por %p209, %p210
      %p212 = scmp.ne.s32.totalorder %s203, %s204
      %p213 = scmp.eq.s32.totalorder %s29, 0
      %p214 = por %p212, %p213
      %p215 = scmp.ne.s32.totalorder %s203, %s204
      %p216 = scmp.eq.s32.totalorder %s30, 1
      %p217 = por %p215, %p216
      %p219 = scmp.ne.s32.totalorder %s204, %s218
      %p220 = scmp.eq.s32.totalorder %s30, 0
      %p221 = por %p219, %p220
      %s223 = sadd.s32 %s222, 1
      %p226 = scmp.eq.s32.totalorder %s24, 1
      %p227 = scmp.ne.s32.totalorder %s222, %s224
      %p228 = scmp.eq.s32.totalorder %s24, 0
      %p229 = por %p227, %p228
      %p230 = scmp.ne.s32.totalorder %s222, %s224
      %p231 = scmp.eq.s32.totalorder %s29, 1
      %p232 = por %p230, %p231
      %p233 = scmp.ne.s32.totalorder %s224, %s225
      %p234 = scmp.eq.s32.totalorder %s29, 0
      %p235 = por %p233, %p234
      %p236 = scmp.ne.s32.totalorder %s224, %s225
      %p237 = scmp.eq.s32.totalorder %s30, 1
      %p238 = por %p236, %p237
      %p240 = scmp.ne.s32.totalorder %s225, %s239
      %p241 = scmp.eq.s32.totalorder %s30, 0
      %p242 = por %p240, %p241
      %s243 = ssub.s32 %s31, %s43
      %s244 = ssub.s32 %s32, %s39
      %s245 = sor.u32 %s243, %s244
      %p246 = scmp.eq.s32.totalorder %s245, 0
      %s248 = sadd.s32 %s247, 1
      %s249 = scalar_select %p246, %s247, %s248
      %p252 = pneg %p246
      %p253 = scmp.eq.s32.totalorder %s24, 1
      %p254 = por %p252, %p253
      %p255 = scmp.ne.s32.totalorder %s247, %s250
      %p256 = scmp.eq.s32.totalorder %s24, 0
      %p257 = por %p255, %p256
      %p258 = scmp.ne.s32.totalorder %s247, %s250
      %p259 = scmp.eq.s32.totalorder %s29, 1
      %p260 = por %p258, %p259
      %p261 = scmp.ne.s32.totalorder %s250, %s251
      %p262 = scmp.eq.s32.totalorder %s29, 0
      %p263 = por %p261, %p262
      %p264 = scmp.ne.s32.totalorder %s250, %s251
      %p265 = scmp.eq.s32.totalorder %s30, 1
      %p266 = por %p264, %p265
      %p268 = scmp.ne.s32.totalorder %s251, %s267
      %p269 = scmp.eq.s32.totalorder %s30, 0
      %p270 = por %p268, %p269
      %s271 = ssub.s32 %s31, %s43
      %s272 = ssub.s32 %s32, %s39
      %s273 = sor.u32 %s271, %s272
      %p274 = scmp.eq.s32.totalorder %s273, 0
      %s276 = sadd.s32 %s275, 1
      %s277 = scalar_select %p274, %s275, %s276
      %p280 = pneg %p274
      %p281 = scmp.eq.s32.totalorder %s24, 1
      %p282 = por %p280, %p281
      %p283 = scmp.ne.s32.totalorder %s275, %s278
      %p284 = scmp.eq.s32.totalorder %s24, 0
      %p285 = por %p283, %p284
      %p286 = scmp.ne.s32.totalorder %s275, %s278
      %p287 = scmp.eq.s32.totalorder %s29, 1
      %p288 = por %p286, %p287
      %p289 = scmp.ne.s32.totalorder %s278, %s279
      %p290 = scmp.eq.s32.totalorder %s29, 0
      %p291 = por %p289, %p290
      %p292 = scmp.ne.s32.totalorder %s278, %s279
      %p293 = scmp.eq.s32.totalorder %s30, 1
      %p294 = por %p292, %p293
      %p296 = scmp.ne.s32.totalorder %s279, %s295
      %p297 = scmp.eq.s32.totalorder %s30, 0
      %p298 = por %p296, %p297
      %p299 = scmp.le.s32.totalorder 1, %s24
      %p300 = scmp.lt.s32.totalorder %s24, 3
      %p301 = pnand %p299, %p300
      %p302 = pneg %p301
      // Predicated region
      $region9: #{tpu_custom_call.1} parent=5 // pred_check
        _
      $region10: #{tpu_custom_call.1} parent=5 // pred_check_branch
        %304 = sbr.rel (%p301) target = $region12
      $region11: #{tpu_custom_call.1} parent=5 // pred_region
        %s305 = ssub.s32 %s24, 1
        // Predicated region
        $region13: #{tpu_custom_call.1} parent=11 // pred_check
          %p306 = pneg %p109
        $region14: #{tpu_custom_call.1} parent=11 // pred_check_branch
          %308 = sbr.rel (%p306) target = $region16
        $region15: #{tpu_custom_call.1} parent=11 // pred_region
          _
        $region16: #{tpu_custom_call.1} parent=11 // pred_fallthru
          _
        // Predicated region
        $region17: #{tpu_custom_call.1} parent=11 // pred_check
          %p309 = pneg %p130
        $region18: #{tpu_custom_call.1} parent=11 // pred_check_branch
          %311 = sbr.rel (%p309) target = $region20
        $region19: #{tpu_custom_call.1} parent=11 // pred_region
          _
        $region20: #{tpu_custom_call.1} parent=11 // pred_fallthru
          _
        // Predicated region
        $region21: #{tpu_custom_call.1} parent=11 // pred_check
          %p312 = pneg %p151
        $region22: #{tpu_custom_call.1} parent=11 // pred_check_branch
          %314 = sbr.rel (%p312) target = $region24
        $region23: #{tpu_custom_call.1} parent=11 // pred_region
          _
        $region24: #{tpu_custom_call.1} parent=11 // pred_fallthru
          _
        // Predicated region
        $region25: #{tpu_custom_call.1} parent=11 // pred_check
          %p315 = pneg %p172
        $region26: #{tpu_custom_call.1} parent=11 // pred_check_branch
          %317 = sbr.rel (%p315) target = $region28
        $region27: #{tpu_custom_call.1} parent=11 // pred_region
          _
        $region28: #{tpu_custom_call.1} parent=11 // pred_fallthru
          _
        // Predicated region
        $region29: #{tpu_custom_call.1} parent=11 // pred_check
          %p318 = pneg %p193
        $region30: #{tpu_custom_call.1} parent=11 // pred_check_branch
          %320 = sbr.rel (%p318) target = $region32
        $region31: #{tpu_custom_call.1} parent=11 // pred_region
          _
        $region32: #{tpu_custom_call.1} parent=11 // pred_fallthru
          _
        // Predicated region
        $region33: #{tpu_custom_call.1} parent=11 // pred_check
          %p321 = pneg %p214
        $region34: #{tpu_custom_call.1} parent=11 // pred_check_branch
          %323 = sbr.rel (%p321) target = $region36
        $region35: #{tpu_custom_call.1} parent=11 // pred_region
          _
        $region36: #{tpu_custom_call.1} parent=11 // pred_fallthru
          _
        // Predicated region
        $region37: #{tpu_custom_call.1} parent=11 // pred_check
          %p324 = pneg %p235
        $region38: #{tpu_custom_call.1} parent=11 // pred_check_branch
          %326 = sbr.rel (%p324) target = $region40
        $region39: #{tpu_custom_call.1} parent=11 // pred_region
          _
        $region40: #{tpu_custom_call.1} parent=11 // pred_fallthru
          _
      $region12: #{tpu_custom_call.1} parent=5 // pred_fallthru
        _
      %p327 = scmp.lt.s32.totalorder %s24, 2
      // Predicated region
      $region41: #{tpu_custom_call.1} parent=5 // pred_check
        %p328 = pneg %p327
      $region42: #{tpu_custom_call.1} parent=5 // pred_check_branch
        %330 = sbr.rel (%p328) target = $region44
      $region43: #{tpu_custom_call.1} parent=5 // pred_region
        // Predicated region
        $region45: #{tpu_custom_call.1} parent=43 // pred_check
          %p331 = pneg %p56
        $region46: #{tpu_custom_call.1} parent=43 // pred_check_branch
          %333 = sbr.rel (%p331) target = $region48
        $region47: #{tpu_custom_call.1} parent=43 // pred_region
          %p334 = scmp.lt.s32.totalorder %s31, 1
          %s335 = scalar_select %p334, %s31, 1
          %s336 = smul.addr %s335, 8
          %s337 = smul.addr %s336, 8
          %s338 = scalar_lea.vmem %s0, %s337
        $region48: #{tpu_custom_call.1} parent=43 // pred_fallthru
          _
        // Predicated region
        $region49: #{tpu_custom_call.1} parent=43 // pred_check
          %p339 = pneg %p82
        $region50: #{tpu_custom_call.1} parent=43 // pred_check_branch
          %341 = sbr.rel (%p339) target = $region52
        $region51: #{tpu_custom_call.1} parent=43 // pred_region
          %p342 = scmp.lt.s32.totalorder %s31, 1
          %s343 = scalar_select %p342, %s31, 1
          %s344 = smul.addr %s343, 32
          %s345 = smul.addr %s344, 8
          %s346 = scalar_lea.vmem %s1, %s345
        $region52: #{tpu_custom_call.1} parent=43 // pred_fallthru
          _
      $region44: #{tpu_custom_call.1} parent=5 // pred_fallthru
        _
      %p347 = scmp.le.s32.totalorder 1, %s24
      %p348 = scmp.lt.s32.totalorder %s24, 3
      %p349 = pnand %p347, %p348
      %p350 = pneg %p349
      // Predicated region
      $region53: #{tpu_custom_call.1} parent=5 // pred_check
        _
      $region54: #{tpu_custom_call.1} parent=5 // pred_check_branch
        %352 = sbr.rel (%p349) target = $region56
      $region55: #{tpu_custom_call.1} parent=5 // pred_region
        %s353 = ssub.s32 %s24, 1
        %p354 = scmp.lt.s32.totalorder %s33, 1
        %s355 = scalar_select %p354, %s33, 1
        %s356 = smul.addr %s355, 8
        %s357 = smul.addr %s356, 8
        %s358 = scalar_lea.vmem %s0, %s357
        %p359 = pneg %p62
        %p360 = pneg %p59
        %p361 = scmp.lt.s32.totalorder %s33, 1
        %s362 = scalar_select %p361, %s33, 1
        %s363 = smul.addr %s362, 32
        %s364 = smul.addr %s363, 8
        %s365 = scalar_lea.vmem %s1, %s364
        %p366 = pneg %p88
        %p367 = pneg %p85
        %p368 = pneg %p109
        %p369 = pneg %p106
        %p370 = pneg %p130
        %p371 = pneg %p127
        %p372 = pneg %p151
        %p373 = pneg %p148
        %p374 = pneg %p172
        %p375 = pneg %p169
        %p376 = pneg %p193
        %p377 = pneg %p190
        %p378 = pneg %p214
        %p379 = pneg %p211
        %p380 = pneg %p235
        %p381 = pneg %p232
        %p382 = pneg %p263
        %p383 = pneg %p260
        %s384 = sand.u32 %s250, 1
        %s385 = scalar_lea.sflag [#allocation4], %s384
        %s386 = sand.u32 %s250, 1
        %s387 = smul.addr %s386, 64
        %s388 = scalar_lea.vmem [#allocation3], %s387
        %p389 = pneg %p291
        %p390 = pneg %p288
        %s391 = sand.u32 %s278, 1
        %s392 = scalar_lea.sflag [#allocation6], %s391
        %s393 = sand.u32 %s278, 1
        %s394 = smul.addr %s393, 512
        %s395 = scalar_lea.vmem [#allocation5], %s394
        %p396 = scmp.lt.s32.totalorder %s33, 1
        %s397 = scalar_select %p396, %s33, 1
        %s398 = smul.addr %s397, 8
        %s399 = smul.addr %s398, 8
        %s400 = scalar_lea.vmem %s0, %s399
        %p401 = scmp.lt.s32.totalorder %s33, 1
        %s402 = scalar_select %p401, %s33, 1
        %s403 = smul.addr %s402, 32
        %s404 = smul.addr %s403, 8
        %s405 = scalar_lea.vmem %s1, %s404
        %s406 = smul.u32 2, %s34
        %s407 = smul.u32 32, %s34
        %v408 = vld [vmem:[%s400] sm:$0xff]
        %v409 = vld [vmem:[%s400 + $0x8] sm:$0xff]
        %v410 = vld [vmem:[%s400 + $0x10] sm:$0xff]
        %v411 = vld [vmem:[%s400 + $0x18] sm:$0xff]
        %v412 = vld [vmem:[%s400 + $0x20] sm:$0xff]
        %v413 = vld [vmem:[%s400 + $0x28] sm:$0xff]
        %v414 = vld [vmem:[%s400 + $0x30] sm:$0xff]
        %v415 = vld [vmem:[%s400 + $0x38] sm:$0xff]
        %v416 = vld [vmem:[%s405] sm:$0xff]
        %v417 = vld [vmem:[%s405 + $0x8] sm:$0xff]
        %v418 = vld [vmem:[%s405 + $0x10] sm:$0xff]
        %v419 = vld [vmem:[%s405 + $0x18] sm:$0xff]
        %v420 = vld [vmem:[%s405 + $0x20] sm:$0xff]
        %v421 = vld [vmem:[%s405 + $0x28] sm:$0xff]
        %v422 = vld [vmem:[%s405 + $0x30] sm:$0xff]
        %v423 = vld [vmem:[%s405 + $0x38] sm:$0xff]
        %v424 = vld [vmem:[%s405 + $0x40] sm:$0xff]
        %v425 = vld [vmem:[%s405 + $0x48] sm:$0xff]
        %v426 = vld [vmem:[%s405 + $0x50] sm:$0xff]
        %v427 = vld [vmem:[%s405 + $0x58] sm:$0xff]
        %v428 = vld [vmem:[%s405 + $0x60] sm:$0xff]
        %v429 = vld [vmem:[%s405 + $0x68] sm:$0xff]
        %v430 = vld [vmem:[%s405 + $0x70] sm:$0xff]
        %v431 = vld [vmem:[%s405 + $0x78] sm:$0xff]
        %v432 = vld [vmem:[%s405 + $0x80] sm:$0xff]
        %v433 = vld [vmem:[%s405 + $0x88] sm:$0xff]
        %v434 = vld [vmem:[%s405 + $0x90] sm:$0xff]
        %v435 = vld [vmem:[%s405 + $0x98] sm:$0xff]
        %v436 = vld [vmem:[%s405 + $0xa0] sm:$0xff]
        %v437 = vld [vmem:[%s405 + $0xa8] sm:$0xff]
        %v438 = vld [vmem:[%s405 + $0xb0] sm:$0xff]
        %v439 = vld [vmem:[%s405 + $0xb8] sm:$0xff]
        %v440 = vld [vmem:[%s405 + $0xc0] sm:$0xff]
        %v441 = vld [vmem:[%s405 + $0xc8] sm:$0xff]
        %v442 = vld [vmem:[%s405 + $0xd0] sm:$0xff]
        %v443 = vld [vmem:[%s405 + $0xd8] sm:$0xff]
        %v444 = vld [vmem:[%s405 + $0xe0] sm:$0xff]
        %v445 = vld [vmem:[%s405 + $0xe8] sm:$0xff]
        %v446 = vld [vmem:[%s405 + $0xf0] sm:$0xff]
        %v447 = vld [vmem:[%s405 + $0xf8] sm:$0xff]
        %s448 = smul.u32 %s34, 256
        %s449 = scalar_lea.vmem %s405, %s448
        %v450 = vld [vmem:[%s449] sm:$0xff]
        %v451 = vld [vmem:[%s449 + $0x8] sm:$0xff]
        %v452 = vld [vmem:[%s449 + $0x10] sm:$0xff]
        %v453 = vld [vmem:[%s449 + $0x18] sm:$0xff]
        %v454 = vld [vmem:[%s449 + $0x20] sm:$0xff]
        %v455 = vld [vmem:[%s449 + $0x28] sm:$0xff]
        %v456 = vld [vmem:[%s449 + $0x30] sm:$0xff]
        %v457 = vld [vmem:[%s449 + $0x38] sm:$0xff]
        %v458 = vld [vmem:[%s449 + $0x40] sm:$0xff]
        %v459 = vld [vmem:[%s449 + $0x48] sm:$0xff]
        %v460 = vld [vmem:[%s449 + $0x50] sm:$0xff]
        %v461 = vld [vmem:[%s449 + $0x58] sm:$0xff]
        %v462 = vld [vmem:[%s449 + $0x60] sm:$0xff]
        %v463 = vld [vmem:[%s449 + $0x68] sm:$0xff]
        %v464 = vld [vmem:[%s449 + $0x70] sm:$0xff]
        %v465 = vld [vmem:[%s449 + $0x78] sm:$0xff]
        %v466 = vld [vmem:[%s449 + $0x80] sm:$0xff]
        %v467 = vld [vmem:[%s449 + $0x88] sm:$0xff]
        %v468 = vld [vmem:[%s449 + $0x90] sm:$0xff]
        %v469 = vld [vmem:[%s449 + $0x98] sm:$0xff]
        %v470 = vld [vmem:[%s449 + $0xa0] sm:$0xff]
        %v471 = vld [vmem:[%s449 + $0xa8] sm:$0xff]
        %v472 = vld [vmem:[%s449 + $0xb0] sm:$0xff]
        %v473 = vld [vmem:[%s449 + $0xb8] sm:$0xff]
        %v474 = vld [vmem:[%s449 + $0xc0] sm:$0xff]
        %v475 = vld [vmem:[%s449 + $0xc8] sm:$0xff]
        %v476 = vld [vmem:[%s449 + $0xd0] sm:$0xff]
        %v477 = vld [vmem:[%s449 + $0xd8] sm:$0xff]
        %v478 = vld [vmem:[%s449 + $0xe0] sm:$0xff]
        %v479 = vld [vmem:[%s449 + $0xe8] sm:$0xff]
        %v480 = vld [vmem:[%s449 + $0xf0] sm:$0xff]
        %v481 = vld [vmem:[%s449 + $0xf8] sm:$0xff]
        %v482 = vld [vmem:[%s2] sm:$0xff]
        %v483 = vld [vmem:[%s2 + $0x8] sm:$0xff]
        %v484 = vld [vmem:[%s2 + $0x10] sm:$0xff]
        %v485 = vld [vmem:[%s2 + $0x18] sm:$0xff]
        %v486 = vld [vmem:[%s3] sm:$0x1]
        %v488 = vlaneseq
        %v489 = vshrl.u32 %v488, 7
        %v490 = vsub.s32 0, %v489
        %v491 = vrot.slane %v486, %v490
        %vm493 = vcmask 261120
        %v495 = vsel %vm493, %v450, 0
        %v498 = vsel %vm493, %v451, 0
        %v501 = vsel %vm493, %v452, 0
        %v504 = vsel %vm493, %v453, 0
        %v507 = vsel %vm493, %v454, 0
        %v510 = vsel %vm493, %v455, 0
        %v513 = vsel %vm493, %v456, 0
        %v516 = vsel %vm493, %v457, 0
        %v519 = vsel %vm493, %v458, 0
        %v522 = vsel %vm493, %v459, 0
        %v525 = vsel %vm493, %v460, 0
        %v528 = vsel %vm493, %v461, 0
        %v531 = vsel %vm493, %v462, 0
        %v534 = vsel %vm493, %v463, 0
        %v537 = vsel %vm493, %v464, 0
        %v540 = vsel %vm493, %v465, 0
        %v543 = vsel %vm493, %v466, 0
        %v546 = vsel %vm493, %v467, 0
        %v549 = vsel %vm493, %v468, 0
        %v552 = vsel %vm493, %v469, 0
        %v555 = vsel %vm493, %v470, 0
        %v558 = vsel %vm493, %v471, 0
        %v561 = vsel %vm493, %v472, 0
        %v564 = vsel %vm493, %v473, 0
        %v567 = vsel %vm493, %v474, 0
        %v570 = vsel %vm493, %v475, 0
        %v573 = vsel %vm493, %v476, 0
        %v576 = vsel %vm493, %v477, 0
        %v579 = vsel %vm493, %v478, 0
        %v582 = vsel %vm493, %v479, 0
        %v585 = vsel %vm493, %v480, 0
        %v588 = vsel %vm493, %v481, 0
        %590 = vmatprep.subr.mxu0 0.0
        %591 = vmatpush1.msra.mxu0 %v482
        %592 = vmatprep.subr.mxu0 0.0
        %593 = vmatpush1.msra.mxu0 %v483
        %594 = vmatprep.subr.mxu0 0.0
        %595 = vmatpush1.msra.mxu0 %v484
        %596 = vmatprep.subr.mxu0 0.0
        %597 = vmatpush1.msra.mxu0 %v485
        %598 = vmatprep.subr.mxu0 0.0
        %599 = vmatpush1.msra.mxu0 0.0
        %600 = vmatprep.subr.mxu0 0.0
        %601 = vmatpush1.msra.mxu0 0.0
        %602 = vmatprep.subr.mxu0 0.0
        %603 = vmatpush1.msra.mxu0 0.0
        %604 = vmatprep.subr.mxu0 0.0
        %605 = vmatpush1.msra.mxu0 0.0
        %606 = vmatprep.subr.mxu0 0.0
        %607 = vmatpush1.msra.mxu0 0.0
        %608 = vmatprep.subr.mxu0 0.0
        %609 = vmatpush1.msra.mxu0 0.0
        %610 = vmatprep.subr.mxu0 0.0
        %611 = vmatpush1.msra.mxu0 0.0
        %612 = vmatprep.subr.mxu0 0.0
        %613 = vmatpush1.msra.mxu0 0.0
        %614 = vmatprep.subr.mxu0 0.0
        %615 = vmatpush1.msra.mxu0 0.0
        %616 = vmatprep.subr.mxu0 0.0
        %617 = vmatpush1.msra.mxu0 0.0
        %618 = vmatprep.subr.mxu0 0.0
        %619 = vmatpush1.msra.mxu0 0.0
        %620 = vmatprep.subr.mxu0 0.0
        %621 = vmatpush1.msra.mxu0 0.0
        %622 = vmatprep.subr.mxu0 0.0
        %623 = vmatpush1.msra.mxu0 0.0
        %624 = vmatprep.subr.mxu0 0.0
        %625 = vmatpush1.msra.mxu0 0.0
        %626 = vmatprep.subr.mxu0 0.0
        %627 = vmatpush1.msra.mxu0 0.0
        %628 = vmatprep.subr.mxu0 0.0
        %629 = vmatpush1.msra.mxu0 0.0
        %630 = vmatprep.subr.mxu0 0.0
        %631 = vmatpush1.msra.mxu0 0.0
        %632 = vmatprep.subr.mxu0 0.0
        %633 = vmatpush1.msra.mxu0 0.0
        %634 = vmatprep.subr.mxu0 0.0
        %635 = vmatpush1.msra.mxu0 0.0
        %636 = vmatprep.subr.mxu0 0.0
        %637 = vmatpush1.msra.mxu0 0.0
        %638 = vmatprep.subr.mxu0 0.0
        %639 = vmatpush1.msra.mxu0 0.0
        %640 = vmatprep.subr.mxu0 0.0
        %641 = vmatpush1.msra.mxu0 0.0
        %642 = vmatprep.subr.mxu0 0.0
        %643 = vmatpush1.msra.mxu0 0.0
        %644 = vmatprep.subr.mxu0 0.0
        %645 = vmatpush1.msra.mxu0 0.0
        %646 = vmatprep.subr.mxu0 0.0
        %647 = vmatpush1.msra.mxu0 0.0
        %648 = vmatprep.subr.mxu0 0.0
        %649 = vmatpush1.msra.mxu0 0.0
        %650 = vmatprep.subr.mxu0 0.0
        %651 = vmatpush1.msra.mxu0 0.0
        %652 = vmatprep.subr.mxu0 0.0
        %653 = vmatpush1.msra.mxu0 0.0
        %654 = vmatprep.mubr.f32.mxu0 0.0
        %655 = vmatmul.mubr.f32.gmra.mrb[0].mxu0 %v495
        %v656 = vpop.f32.mrb[0].mxu0
        %v657 = vadd.f32 %v491, %v656
        %v658 = vpop.f32.mrb[0].mxu0
        %659 = vmatprep.mubr.f32.mxu0 0.0
        %660 = vmatmul.mubr.f32.gmra.mrb[0].mxu0 %v498
        %v661 = vpop.f32.mrb[0].mxu0
        %v662 = vadd.f32 %v491, %v661
        %v663 = vpop.f32.mrb[0].mxu0
        %664 = vmatprep.mubr.f32.mxu0 0.0
        %665 = vmatmul.mubr.f32.gmra.mrb[0].mxu0 %v501
        %v666 = vpop.f32.mrb[0].mxu0
        %v667 = vadd.f32 %v491, %v666
        %v668 = vpop.f32.mrb[0].mxu0
        %669 = vmatprep.mubr.f32.mxu0 0.0
        %670 = vmatmul.mubr.f32.gmra.mrb[0].mxu0 %v504
        %v671 = vpop.f32.mrb[0].mxu0
        %v672 = vadd.f32 %v491, %v671
        %v673 = vpop.f32.mrb[0].mxu0
        %674 = vmatprep.mubr.f32.mxu0 0.0
        %675 = vmatmul.mubr.f32.gmra.mrb[0].mxu0 %v507
        %v676 = vpop.f32.mrb[0].mxu0
        %v677 = vadd.f32 %v491, %v676
        %v678 = vpop.f32.mrb[0].mxu0
        %679 = vmatprep.mubr.f32.mxu0 0.0
        %680 = vmatmul.mubr.f32.gmra.mrb[0].mxu0 %v510
        %v681 = vpop.f32.mrb[0].mxu0
        %v682 = vadd.f32 %v491, %v681
        %v683 = vpop.f32.mrb[0].mxu0
        %684 = vmatprep.mubr.f32.mxu0 0.0
        %685 = vmatmul.mubr.f32.gmra.mrb[0].mxu0 %v513
        %v686 = vpop.f32.mrb[0].mxu0
        %v687 = vadd.f32 %v491, %v686
        %v688 = vpop.f32.mrb[0].mxu0
        %689 = vmatprep.mubr.f32.mxu0 0.0
        %690 = vmatmul.mubr.f32.gmra.mrb[0].mxu0 %v516
        %v691 = vpop.f32.mrb[0].mxu0
        %v692 = vadd.f32 %v491, %v691
        %v693 = vpop.f32.mrb[0].mxu0
        %694 = vmatprep.mubr.f32.mxu0 0.0
        %695 = vmatmul.mubr.f32.gmra.mrb[0].mxu0 %v519
        %v696 = vpop.f32.mrb[0].mxu0
        %v697 = vadd.f32 %v491, %v696
        %v698 = vpop.f32.mrb[0].mxu0
        %699 = vmatprep.mubr.f32.mxu0 0.0
        %700 = vmatmul.mubr.f32.gmra.mrb[0].mxu0 %v522
        %v701 = vpop.f32.mrb[0].mxu0
        %v702 = vadd.f32 %v491, %v701
        %v703 = vpop.f32.mrb[0].mxu0
        %704 = vmatprep.mubr.f32.mxu0 0.0
        %705 = vmatmul.mubr.f32.gmra.mrb[0].mxu0 %v525
        %v706 = vpop.f32.mrb[0].mxu0
        %v707 = vadd.f32 %v491, %v706
        %v708 = vpop.f32.mrb[0].mxu0
        %709 = vmatprep.mubr.f32.mxu0 0.0
        %710 = vmatmul.mubr.f32.gmra.mrb[0].mxu0 %v528
        %v711 = vpop.f32.mrb[0].mxu0
        %v712 = vadd.f32 %v491, %v711
        %v713 = vpop.f32.mrb[0].mxu0
        %714 = vmatprep.mubr.f32.mxu0 0.0
        %715 = vmatmul.mubr.f32.gmra.mrb[0].mxu0 %v531
        %v716 = vpop.f32.mrb[0].mxu0
        %v717 = vadd.f32 %v491, %v716
        %v718 = vpop.f32.mrb[0].mxu0
        %719 = vmatprep.mubr.f32.mxu0 0.0
        %720 = vmatmul.mubr.f32.gmra.mrb[0].mxu0 %v534
        %v721 = vpop.f32.mrb[0].mxu0
        %v722 = vadd.f32 %v491, %v721
        %v723 = vpop.f32.mrb[0].mxu0
        %724 = vmatprep.mubr.f32.mxu0 0.0
        %725 = vmatmul.mubr.f32.gmra.mrb[0].mxu0 %v537
        %v726 = vpop.f32.mrb[0].mxu0
        %v727 = vadd.f32 %v491, %v726
        %v728 = vpop.f32.mrb[0].mxu0
        %729 = vmatprep.mubr.f32.mxu0 0.0
        %730 = vmatmul.mubr.f32.gmra.mrb[0].mxu0 %v540
        %v731 = vpop.f32.mrb[0].mxu0
        %v732 = vadd.f32 %v491, %v731
        %v733 = vpop.f32.mrb[0].mxu0
        %734 = vmatprep.mubr.f32.mxu0 0.0
        %735 = vmatmul.mubr.f32.gmra.mrb[0].mxu0 %v543
        %v736 = vpop.f32.mrb[0].mxu0
        %v737 = vadd.f32 %v491, %v736
        %v738 = vpop.f32.mrb[0].mxu0
        %739 = vmatprep.mubr.f32.mxu0 0.0
        %740 = vmatmul.mubr.f32.gmra.mrb[0].mxu0 %v546
        %v741 = vpop.f32.mrb[0].mxu0
        %v742 = vadd.f32 %v491, %v741
        %v743 = vpop.f32.mrb[0].mxu0
        %744 = vmatprep.mubr.f32.mxu0 0.0
        %745 = vmatmul.mubr.f32.gmra.mrb[0].mxu0 %v549
        %v746 = vpop.f32.mrb[0].mxu0
        %v747 = vadd.f32 %v491, %v746
        %v748 = vpop.f32.mrb[0].mxu0
        %749 = vmatprep.mubr.f32.mxu0 0.0
        %750 = vmatmul.mubr.f32.gmra.mrb[0].mxu0 %v552
        %v751 = vpop.f32.mrb[0].mxu0
        %v752 = vadd.f32 %v491, %v751
        %v753 = vpop.f32.mrb[0].mxu0
        %754 = vmatprep.mubr.f32.mxu0 0.0
        %755 = vmatmul.mubr.f32.gmra.mrb[0].mxu0 %v555
        %v756 = vpop.f32.mrb[0].mxu0
        %v757 = vadd.f32 %v491, %v756
        %v758 = vpop.f32.mrb[0].mxu0
        %759 = vmatprep.mubr.f32.mxu0 0.0
        %760 = vmatmul.mubr.f32.gmra.mrb[0].mxu0 %v558
        %v761 = vpop.f32.mrb[0].mxu0
        %v762 = vadd.f32 %v491, %v761
        %v763 = vpop.f32.mrb[0].mxu0
        %764 = vmatprep.mubr.f32.mxu0 0.0
        %765 = vmatmul.mubr.f32.gmra.mrb[0].mxu0 %v561
        %v766 = vpop.f32.mrb[0].mxu0
        %v767 = vadd.f32 %v491, %v766
        %v768 = vpop.f32.mrb[0].mxu0
        %769 = vmatprep.mubr.f32.mxu0 0.0
        %770 = vmatmul.mubr.f32.gmra.mrb[0].mxu0 %v564
        %v771 = vpop.f32.mrb[0].mxu0
        %v772 = vadd.f32 %v491, %v771
        %v773 = vpop.f32.mrb[0].mxu0
        %774 = vmatprep.mubr.f32.mxu0 0.0
        %775 = vmatmul.mubr.f32.gmra.mrb[0].mxu0 %v567
        %v776 = vpop.f32.mrb[0].mxu0
        %v777 = vadd.f32 %v491, %v776
        %v778 = vpop.f32.mrb[0].mxu0
        %779 = vmatprep.mubr.f32.mxu0 0.0
        %780 = vmatmul.mubr.f32.gmra.mrb[0].mxu0 %v570
        %v781 = vpop.f32.mrb[0].mxu0
        %v782 = vadd.f32 %v491, %v781
        %v783 = vpop.f32.mrb[0].mxu0
        %784 = vmatprep.mubr.f32.mxu0 0.0
        %785 = vmatmul.mubr.f32.gmra.mrb[0].mxu0 %v573
        %v786 = vpop.f32.mrb[0].mxu0
        %v787 = vadd.f32 %v491, %v786
        %v788 = vpop.f32.mrb[0].mxu0
        %789 = vmatprep.mubr.f32.mxu0 0.0
        %790 = vmatmul.mubr.f32.gmra.mrb[0].mxu0 %v576
        %v791 = vpop.f32.mrb[0].mxu0
        %v792 = vadd.f32 %v491, %v791
        %v793 = vpop.f32.mrb[0].mxu0
        %794 = vmatprep.mubr.f32.mxu0 0.0
        %795 = vmatmul.mubr.f32.gmra.mrb[0].mxu0 %v579
        %v796 = vpop.f32.mrb[0].mxu0
        %v797 = vadd.f32 %v491, %v796
        %v798 = vpop.f32.mrb[0].mxu0
        %799 = vmatprep.mubr.f32.mxu0 0.0
        %800 = vmatmul.mubr.f32.gmra.mrb[0].mxu0 %v582
        %v801 = vpop.f32.mrb[0].mxu0
        %v802 = vadd.f32 %v491, %v801
        %v803 = vpop.f32.mrb[0].mxu0
        %804 = vmatprep.mubr.f32.mxu0 0.0
        %805 = vmatmul.mubr.f32.gmra.mrb[0].mxu0 %v585
        %v806 = vpop.f32.mrb[0].mxu0
        %v807 = vadd.f32 %v491, %v806
        %v808 = vpop.f32.mrb[0].mxu0
        %809 = vmatprep.mubr.f32.mxu0 0.0
        %810 = vmatmul.mubr.f32.gmra.mrb[0].mxu0 %v588
        %v811 = vpop.f32.mrb[0].mxu0
        %v812 = vadd.f32 %v491, %v811
        %v813 = vpop.f32.mrb[0].mxu0
        %814 = vdwg.mxu0
        %v815 = vld [vmem:[%s4] sm:$0xf]
        %v816 = vld [vmem:[%s5] sm:$0xf]
        %818 = vset.pattern.permute.xlu0 0
        %819 = vperm.xlu0 %818, %v816
        %v820 = vpop.permute.xlu0 %819
        %v823 = vsel %vm493, %v815, 0
        %825 = vmatprep.subr.mxu0 %v409
        %826 = vmatpush1.msra.mxu0 %v408
        %827 = vmatprep.subr.mxu0 %v411
        %828 = vmatpush1.msra.mxu0 %v410
        %829 = vmatprep.subr.mxu0 %v413
        %830 = vmatpush1.msra.mxu0 %v412
        %831 = vmatprep.subr.mxu0 %v415
        %832 = vmatpush1.msra.mxu0 %v414
        %833 = vmatprep.subr.mxu0 0.0
        %834 = vmatpush1.msra.mxu0 0.0
        %835 = vmatprep.subr.mxu0 0.0
        %836 = vmatpush1.msra.mxu0 0.0
        %837 = vmatprep.subr.mxu0 0.0
        %838 = vmatpush1.msra.mxu0 0.0
        %839 = vmatprep.subr.mxu0 0.0
        %840 = vmatpush1.msra.mxu0 0.0
        %841 = vmatprep.subr.mxu0 0.0
        %842 = vmatpush1.msra.mxu0 0.0
        %843 = vmatprep.subr.mxu0 0.0
        %844 = vmatpush1.msra.mxu0 0.0
        %845 = vmatprep.subr.mxu0 0.0
        %846 = vmatpush1.msra.mxu0 0.0
        %847 = vmatprep.subr.mxu0 0.0
        %848 = vmatpush1.msra.mxu0 0.0
        %849 = vmatprep.subr.mxu0 0.0
        %850 = vmatpush1.msra.mxu0 0.0
        %851 = vmatprep.subr.mxu0 0.0
        %852 = vmatpush1.msra.mxu0 0.0
        %853 = vmatprep.subr.mxu0 0.0
        %854 = vmatpush1.msra.mxu0 0.0
        %855 = vmatprep.subr.mxu0 0.0
        %856 = vmatpush1.msra.mxu0 0.0
        %857 = vmatprep.subr.mxu0 0.0
        %858 = vmatpush1.msra.mxu0 0.0
        %859 = vmatprep.subr.mxu0 0.0
        %860 = vmatpush1.msra.mxu0 0.0
        %861 = vmatprep.subr.mxu0 0.0
        %862 = vmatpush1.msra.mxu0 0.0
        %863 = vmatprep.subr.mxu0 0.0
        %864 = vmatpush1.msra.mxu0 0.0
        %865 = vmatprep.subr.mxu0 0.0
        %866 = vmatpush1.msra.mxu0 0.0
        %867 = vmatprep.subr.mxu0 0.0
        %868 = vmatpush1.msra.mxu0 0.0
        %869 = vmatprep.subr.mxu0 0.0
        %870 = vmatpush1.msra.mxu0 0.0
        %871 = vmatprep.subr.mxu0 0.0
        %872 = vmatpush1.msra.mxu0 0.0
        %873 = vmatprep.subr.mxu0 0.0
        %874 = vmatpush1.msra.mxu0 0.0
        %875 = vmatprep.subr.mxu0 0.0
        %876 = vmatpush1.msra.mxu0 0.0
        %877 = vmatprep.subr.mxu0 0.0
        %878 = vmatpush1.msra.mxu0 0.0
        %879 = vmatprep.subr.mxu0 0.0
        %880 = vmatpush1.msra.mxu0 0.0
        %881 = vmatprep.subr.mxu0 0.0
        %882 = vmatpush1.msra.mxu0 0.0
        %883 = vmatprep.subr.mxu0 0.0
        %884 = vmatpush1.msra.mxu0 0.0
        %885 = vmatprep.subr.mxu0 0.0
        %886 = vmatpush1.msra.mxu0 0.0
        %887 = vmatprep.subr.mxu0 0.0
        %888 = vmatpush1.msra.mxu0 0.0
        %889 = vmatprep.mubr.f32.mxu0 0.0
        %890 = vmatmul.mubr.f32.gmra.mrb[0].mxu0 %v823
        %v891 = vpop.f32.mrb[0].mxu0
        %v892 = vadd.f32 %v820, %v891
        %v893 = vpop.f32.mrb[0].mxu0
        %v894 = vadd.f32 %v820, %v893
        %895 = vdwg.mxu0
        %v896 = vld [vmem:[%s6] sm:$0xff]
        %v897 = vld [vmem:[%s6 + $0x8] sm:$0xff]
        %v898 = vld [vmem:[%s6 + $0x10] sm:$0xff]
        %v899 = vld [vmem:[%s6 + $0x18] sm:$0xff]
        %v900 = vld [vmem:[%s7] sm:$0x1]
        %v902 = vlaneseq
        %v903 = vshrl.u32 %v902, 7
        %v904 = vsub.s32 0, %v903
        %v905 = vrot.slane %v900, %v904
        %v908 = vsel %vm493, %v416, 0
        %v911 = vsel %vm493, %v417, 0
        %v914 = vsel %vm493, %v418, 0
        %v917 = vsel %vm493, %v419, 0
        %v920 = vsel %vm493, %v420, 0
        %v923 = vsel %vm493, %v421, 0
        %v926 = vsel %vm493, %v422, 0
        %v929 = vsel %vm493, %v423, 0
        %v932 = vsel %vm493, %v424, 0
        %v935 = vsel %vm493, %v425, 0
        %v938 = vsel %vm493, %v426, 0
        %v941 = vsel %vm493, %v427, 0
        %v944 = vsel %vm493, %v428, 0
        %v947 = vsel %vm493, %v429, 0
        %v950 = vsel %vm493, %v430, 0
        %v953 = vsel %vm493, %v431, 0
        %v956 = vsel %vm493, %v432, 0
        %v959 = vsel %vm493, %v433, 0
        %v962 = vsel %vm493, %v434, 0
        %v965 = vsel %vm493, %v435, 0
        %v968 = vsel %vm493, %v436, 0
        %v971 = vsel %vm493, %v437, 0
        %v974 = vsel %vm493, %v438, 0
        %v977 = vsel %vm493, %v439, 0
        %v980 = vsel %vm493, %v440, 0
        %v983 = vsel %vm493, %v441, 0
        %v986 = vsel %vm493, %v442, 0
        %v989 = vsel %vm493, %v443, 0
        %v992 = vsel %vm493, %v444, 0
        %v995 = vsel %vm493, %v445, 0
        %v998 = vsel %vm493, %v446, 0
        %v1001 = vsel %vm493, %v447, 0
        %1003 = vmatprep.subr.mxu0 0.0
        %1004 = vmatpush1.msra.mxu0 %v896
        %1005 = vmatprep.subr.mxu0 0.0
        %1006 = vmatpush1.msra.mxu0 %v897
        %1007 = vmatprep.subr.mxu0 0.0
        %1008 = vmatpush1.msra.mxu0 %v898
        %1009 = vmatprep.subr.mxu0 0.0
        %1010 = vmatpush1.msra.mxu0 %v899
        %1011 = vmatprep.subr.mxu0 0.0
        %1012 = vmatpush1.msra.mxu0 0.0
        %1013 = vmatprep.subr.mxu0 0.0
        %1014 = vmatpush1.msra.mxu0 0.0
        %1015 = vmatprep.subr.mxu0 0.0
        %1016 = vmatpush1.msra.mxu0 0.0
        %1017 = vmatprep.subr.mxu0 0.0
        %1018 = vmatpush1.msra.mxu0 0.0
        %1019 = vmatprep.subr.mxu0 0.0
        %1020 = vmatpush1.msra.mxu0 0.0
        %1021 = vmatprep.subr.mxu0 0.0
        %1022 = vmatpush1.msra.mxu0 0.0
        %1023 = vmatprep.subr.mxu0 0.0
        %1024 = vmatpush1.msra.mxu0 0.0
        %1025 = vmatprep.subr.mxu0 0.0
        %1026 = vmatpush1.msra.mxu0 0.0
        %1027 = vmatprep.subr.mxu0 0.0
        %1028 = vmatpush1.msra.mxu0 0.0
        %1029 = vmatprep.subr.mxu0 0.0
        %1030 = vmatpush1.msra.mxu0 0.0
        %1031 = vmatprep.subr.mxu0 0.0
        %1032 = vmatpush1.msra.mxu0 0.0
        %1033 = vmatprep.subr.mxu0 0.0
        %1034 = vmatpush1.msra.mxu0 0.0
        %1035 = vmatprep.subr.mxu0 0.0
        %1036 = vmatpush1.msra.mxu0 0.0
        %1037 = vmatprep.subr.mxu0 0.0
        %1038 = vmatpush1.msra.mxu0 0.0
        %1039 = vmatprep.subr.mxu0 0.0
        %1040 = vmatpush1.msra.mxu0 0.0
        %1041 = vmatprep.subr.mxu0 0.0
        %1042 = vmatpush1.msra.mxu0 0.0
        %1043 = vmatprep.subr.mxu0 0.0
        %1044 = vmatpush1.msra.mxu0 0.0
        %1045 = vmatprep.subr.mxu0 0.0
        %1046 = vmatpush1.msra.mxu0 0.0
        %1047 = vmatprep.subr.mxu0 0.0
        %1048 = vmatpush1.msra.mxu0 0.0
        %1049 = vmatprep.subr.mxu0 0.0
        %1050 = vmatpush1.msra.mxu0 0.0
        %1051 = vmatprep.subr.mxu0 0.0
        %1052 = vmatpush1.msra.mxu0 0.0
        %1053 = vmatprep.subr.mxu0 0.0
        %1054 = vmatpush1.msra.mxu0 0.0
        %1055 = vmatprep.subr.mxu0 0.0
        %1056 = vmatpush1.msra.mxu0 0.0
        %1057 = vmatprep.subr.mxu0 0.0
        %1058 = vmatpush1.msra.mxu0 0.0
        %1059 = vmatprep.subr.mxu0 0.0
        %1060 = vmatpush1.msra.mxu0 0.0
        %1061 = vmatprep.subr.mxu0 0.0
        %1062 = vmatpush1.msra.mxu0 0.0
        %1063 = vmatprep.subr.mxu0 0.0
        %1064 = vmatpush1.msra.mxu0 0.0
        %1065 = vmatprep.subr.mxu0 0.0
        %1066 = vmatpush1.msra.mxu0 0.0
        %1067 = vmatprep.mubr.f32.mxu0 0.0
        %1068 = vmatmul.mubr.f32.gmra.mrb[0].mxu0 %v908
        %v1069 = vpop.f32.mrb[0].mxu0
        %v1070 = vadd.f32 %v905, %v1069
        %v1071 = vpop.f32.mrb[0].mxu0
        %1072 = vmatprep.mubr.f32.mxu0 0.0
        %1073 = vmatmul.mubr.f32.gmra.mrb[0].mxu0 %v911
        %v1074 = vpop.f32.mrb[0].mxu0
        %v1075 = vadd.f32 %v905, %v1074
        %v1076 = vpop.f32.mrb[0].mxu0
        %1077 = vmatprep.mubr.f32.mxu0 0.0
        %1078 = vmatmul.mubr.f32.gmra.mrb[0].mxu0 %v914
        %v1079 = vpop.f32.mrb[0].mxu0
        %v1080 = vadd.f32 %v905, %v1079
        %v1081 = vpop.f32.mrb[0].mxu0
        %1082 = vmatprep.mubr.f32.mxu0 0.0
        %1083 = vmatmul.mubr.f32.gmra.mrb[0].mxu0 %v917
        %v1084 = vpop.f32.mrb[0].mxu0
        %v1085 = vadd.f32 %v905, %v1084
        %v1086 = vpop.f32.mrb[0].mxu0
        %1087 = vmatprep.mubr.f32.mxu0 0.0
        %1088 = vmatmul.mubr.f32.gmra.mrb[0].mxu0 %v920
        %v1089 = vpop.f32.mrb[0].mxu0
        %v1090 = vadd.f32 %v905, %v1089
        %v1091 = vpop.f32.mrb[0].mxu0
        %1092 = vmatprep.mubr.f32.mxu0 0.0
        %1093 = vmatmul.mubr.f32.gmra.mrb[0].mxu0 %v923
        %v1094 = vpop.f32.mrb[0].mxu0
        %v1095 = vadd.f32 %v905, %v1094
        %v1096 = vpop.f32.mrb[0].mxu0
        %1097 = vmatprep.mubr.f32.mxu0 0.0
        %1098 = vmatmul.mubr.f32.gmra.mrb[0].mxu0 %v926
        %v1099 = vpop.f32.mrb[0].mxu0
        %v1100 = vadd.f32 %v905, %v1099
        %v1101 = vpop.f32.mrb[0].mxu0
        %1102 = vmatprep.mubr.f32.mxu0 0.0
        %1103 = vmatmul.mubr.f32.gmra.mrb[0].mxu0 %v929
        %v1104 = vpop.f32.mrb[0].mxu0
        %v1105 = vadd.f32 %v905, %v1104
        %v1106 = vpop.f32.mrb[0].mxu0
        %1107 = vmatprep.mubr.f32.mxu0 0.0
        %1108 = vmatmul.mubr.f32.gmra.mrb[0].mxu0 %v932
        %v1109 = vpop.f32.mrb[0].mxu0
        %v1110 = vadd.f32 %v905, %v1109
        %v1111 = vpop.f32.mrb[0].mxu0
        %1112 = vmatprep.mubr.f32.mxu0 0.0
        %1113 = vmatmul.mubr.f32.gmra.mrb[0].mxu0 %v935
        %v1114 = vpop.f32.mrb[0].mxu0
        %v1115 = vadd.f32 %v905, %v1114
        %v1116 = vpop.f32.mrb[0].mxu0
        %1117 = vmatprep.mubr.f32.mxu0 0.0
        %1118 = vmatmul.mubr.f32.gmra.mrb[0].mxu0 %v938
        %v1119 = vpop.f32.mrb[0].mxu0
        %v1120 = vadd.f32 %v905, %v1119
        %v1121 = vpop.f32.mrb[0].mxu0
        %1122 = vmatprep.mubr.f32.mxu0 0.0
        %1123 = vmatmul.mubr.f32.gmra.mrb[0].mxu0 %v941
        %v1124 = vpop.f32.mrb[0].mxu0
        %v1125 = vadd.f32 %v905, %v1124
        %v1126 = vpop.f32.mrb[0].mxu0
        %1127 = vmatprep.mubr.f32.mxu0 0.0
        %1128 = vmatmul.mubr.f32.gmra.mrb[0].mxu0 %v944
        %v1129 = vpop.f32.mrb[0].mxu0
        %v1130 = vadd.f32 %v905, %v1129
        %v1131 = vpop.f32.mrb[0].mxu0
        %1132 = vmatprep.mubr.f32.mxu0 0.0
        %1133 = vmatmul.mubr.f32.gmra.mrb[0].mxu0 %v947
        %v1134 = vpop.f32.mrb[0].mxu0
        %v1135 = vadd.f32 %v905, %v1134
        %v1136 = vpop.f32.mrb[0].mxu0
        %1137 = vmatprep.mubr.f32.mxu0 0.0
        %1138 = vmatmul.mubr.f32.gmra.mrb[0].mxu0 %v950
        %v1139 = vpop.f32.mrb[0].mxu0
        %v1140 = vadd.f32 %v905, %v1139
        %v1141 = vpop.f32.mrb[0].mxu0
        %1142 = vmatprep.mubr.f32.mxu0 0.0
        %1143 = vmatmul.mubr.f32.gmra.mrb[0].mxu0 %v953
        %v1144 = vpop.f32.mrb[0].mxu0
        %v1145 = vadd.f32 %v905, %v1144
        %v1146 = vpop.f32.mrb[0].mxu0
        %1147 = vmatprep.mubr.f32.mxu0 0.0
        %1148 = vmatmul.mubr.f32.gmra.mrb[0].mxu0 %v956
        %v1149 = vpop.f32.mrb[0].mxu0
        %v1150 = vadd.f32 %v905, %v1149
        %v1151 = vpop.f32.mrb[0].mxu0
        %1152 = vmatprep.mubr.f32.mxu0 0.0
        %1153 = vmatmul.mubr.f32.gmra.mrb[0].mxu0 %v959
        %v1154 = vpop.f32.mrb[0].mxu0
        %v1155 = vadd.f32 %v905, %v1154
        %v1156 = vpop.f32.mrb[0].mxu0
        %1157 = vmatprep.mubr.f32.mxu0 0.0
        %1158 = vmatmul.mubr.f32.gmra.mrb[0].mxu0 %v962
        %v1159 = vpop.f32.mrb[0].mxu0
        %v1160 = vadd.f32 %v905, %v1159
        %v1161 = vpop.f32.mrb[0].mxu0
        %1162 = vmatprep.mubr.f32.mxu0 0.0
        %1163 = vmatmul.mubr.f32.gmra.mrb[0].mxu0 %v965
        %v1164 = vpop.f32.mrb[0].mxu0
        %v1165 = vadd.f32 %v905, %v1164
        %v1166 = vpop.f32.mrb[0].mxu0
        %1167 = vmatprep.mubr.f32.mxu0 0.0
        %1168 = vmatmul.mubr.f32.gmra.mrb[0].mxu0 %v968
        %v1169 = vpop.f32.mrb[0].mxu0
        %v1170 = vadd.f32 %v905, %v1169
        %v1171 = vpop.f32.mrb[0].mxu0
        %1172 = vmatprep.mubr.f32.mxu0 0.0
        %1173 = vmatmul.mubr.f32.gmra.mrb[0].mxu0 %v971
        %v1174 = vpop.f32.mrb[0].mxu0
        %v1175 = vadd.f32 %v905, %v1174
        %v1176 = vpop.f32.mrb[0].mxu0
        %1177 = vmatprep.mubr.f32.mxu0 0.0
        %1178 = vmatmul.mubr.f32.gmra.mrb[0].mxu0 %v974
        %v1179 = vpop.f32.mrb[0].mxu0
        %v1180 = vadd.f32 %v905, %v1179
        %v1181 = vpop.f32.mrb[0].mxu0
        %1182 = vmatprep.mubr.f32.mxu0 0.0
        %1183 = vmatmul.mubr.f32.gmra.mrb[0].mxu0 %v977
        %v1184 = vpop.f32.mrb[0].mxu0
        %v1185 = vadd.f32 %v905, %v1184
        %v1186 = vpop.f32.mrb[0].mxu0
        %1187 = vmatprep.mubr.f32.mxu0 0.0
        %1188 = vmatmul.mubr.f32.gmra.mrb[0].mxu0 %v980
        %v1189 = vpop.f32.mrb[0].mxu0
        %v1190 = vadd.f32 %v905, %v1189
        %v1191 = vpop.f32.mrb[0].mxu0
        %1192 = vmatprep.mubr.f32.mxu0 0.0
        %1193 = vmatmul.mubr.f32.gmra.mrb[0].mxu0 %v983
        %v1194 = vpop.f32.mrb[0].mxu0
        %v1195 = vadd.f32 %v905, %v1194
        %v1196 = vpop.f32.mrb[0].mxu0
        %1197 = vmatprep.mubr.f32.mxu0 0.0
        %1198 = vmatmul.mubr.f32.gmra.mrb[0].mxu0 %v986
        %v1199 = vpop.f32.mrb[0].mxu0
        %v1200 = vadd.f32 %v905, %v1199
        %v1201 = vpop.f32.mrb[0].mxu0
        %1202 = vmatprep.mubr.f32.mxu0 0.0
        %1203 = vmatmul.mubr.f32.gmra.mrb[0].mxu0 %v989
        %v1204 = vpop.f32.mrb[0].mxu0
        %v1205 = vadd.f32 %v905, %v1204
        %v1206 = vpop.f32.mrb[0].mxu0
        %1207 = vmatprep.mubr.f32.mxu0 0.0
        %1208 = vmatmul.mubr.f32.gmra.mrb[0].mxu0 %v992
        %v1209 = vpop.f32.mrb[0].mxu0
        %v1210 = vadd.f32 %v905, %v1209
        %v1211 = vpop.f32.mrb[0].mxu0
        %1212 = vmatprep.mubr.f32.mxu0 0.0
        %1213 = vmatmul.mubr.f32.gmra.mrb[0].mxu0 %v995
        %v1214 = vpop.f32.mrb[0].mxu0
        %v1215 = vadd.f32 %v905, %v1214
        %v1216 = vpop.f32.mrb[0].mxu0
        %1217 = vmatprep.mubr.f32.mxu0 0.0
        %1218 = vmatmul.mubr.f32.gmra.mrb[0].mxu0 %v998
        %v1219 = vpop.f32.mrb[0].mxu0
        %v1220 = vadd.f32 %v905, %v1219
        %v1221 = vpop.f32.mrb[0].mxu0
        %1222 = vmatprep.mubr.f32.mxu0 0.0
        %1223 = vmatmul.mubr.f32.gmra.mrb[0].mxu0 %v1001
        %v1224 = vpop.f32.mrb[0].mxu0
        %v1225 = vadd.f32 %v905, %v1224
        %v1226 = vpop.f32.mrb[0].mxu0
        %1227 = vdwg.mxu0
        %vm1228 = vcmask 31744
        %v1230 = vsel %vm1228, %v657, 0
        %v1233 = vsel %vm1228, %v662, 0
        %v1236 = vsel %vm1228, %v667, 0
        %v1239 = vsel %vm1228, %v672, 0
        %v1242 = vsel %vm1228, %v677, 0
        %v1245 = vsel %vm1228, %v682, 0
        %v1248 = vsel %vm1228, %v687, 0
        %v1251 = vsel %vm1228, %v692, 0
        %v1254 = vsel %vm1228, %v697, 0
        %v1257 = vsel %vm1228, %v702, 0
        %v1260 = vsel %vm1228, %v707, 0
        %v1263 = vsel %vm1228, %v712, 0
        %v1266 = vsel %vm1228, %v717, 0
        %v1269 = vsel %vm1228, %v722, 0
        %v1272 = vsel %vm1228, %v727, 0
        %v1275 = vsel %vm1228, %v732, 0
        %v1278 = vsel %vm1228, %v737, 0
        %v1281 = vsel %vm1228, %v742, 0
        %v1284 = vsel %vm1228, %v747, 0
        %v1287 = vsel %vm1228, %v752, 0
        %v1290 = vsel %vm1228, %v757, 0
        %v1293 = vsel %vm1228, %v762, 0
        %v1296 = vsel %vm1228, %v767, 0
        %v1299 = vsel %vm1228, %v772, 0
        %v1302 = vsel %vm1228, %v777, 0
        %v1305 = vsel %vm1228, %v782, 0
        %v1308 = vsel %vm1228, %v787, 0
        %v1311 = vsel %vm1228, %v792, 0
        %v1314 = vsel %vm1228, %v797, 0
        %v1317 = vsel %vm1228, %v802, 0
        %v1320 = vsel %vm1228, %v807, 0
        %v1323 = vsel %vm1228, %v812, 0
        %vm1325 = vcmask 1043456
        %v1327 = vsel %vm1325, %v892, 0
        %v1330 = vsel %vm1325, %v894, 0
        %1332 = vmatprep.subr.mxu0 %v1330
        %1333 = vmatpush1.msra.mxu0 %v1327
        %1334 = vmatprep.subr.mxu0 0.0
        %1335 = vmatpush1.msra.mxu0 0.0
        %1336 = vmatprep.subr.mxu0 0.0
        %1337 = vmatpush1.msra.mxu0 0.0
        %1338 = vmatprep.subr.mxu0 0.0
        %1339 = vmatpush1.msra.mxu0 0.0
        %1340 = vmatprep.subr.mxu0 0.0
        %1341 = vmatpush1.msra.mxu0 0.0
        %1342 = vmatprep.subr.mxu0 0.0
        %1343 = vmatpush1.msra.mxu0 0.0
        %1344 = vmatprep.subr.mxu0 0.0
        %1345 = vmatpush1.msra.mxu0 0.0
        %1346 = vmatprep.subr.mxu0 0.0
        %1347 = vmatpush1.msra.mxu0 0.0
        %1348 = vmatprep.subr.mxu0 0.0
        %1349 = vmatpush1.msra.mxu0 0.0
        %1350 = vmatprep.subr.mxu0 0.0
        %1351 = vmatpush1.msra.mxu0 0.0
        %1352 = vmatprep.subr.mxu0 0.0
        %1353 = vmatpush1.msra.mxu0 0.0
        %1354 = vmatprep.subr.mxu0 0.0
        %1355 = vmatpush1.msra.mxu0 0.0
        %1356 = vmatprep.subr.mxu0 0.0
        %1357 = vmatpush1.msra.mxu0 0.0
        %1358 = vmatprep.subr.mxu0 0.0
        %1359 = vmatpush1.msra.mxu0 0.0
        %1360 = vmatprep.subr.mxu0 0.0
        %1361 = vmatpush1.msra.mxu0 0.0
        %1362 = vmatprep.subr.mxu0 0.0
        %1363 = vmatpush1.msra.mxu0 0.0
        %1364 = vmatprep.subr.mxu0 0.0
        %1365 = vmatpush1.msra.mxu0 0.0
        %1366 = vmatprep.subr.mxu0 0.0
        %1367 = vmatpush1.msra.mxu0 0.0
        %1368 = vmatprep.subr.mxu0 0.0
        %1369 = vmatpush1.msra.mxu0 0.0
        %1370 = vmatprep.subr.mxu0 0.0
        %1371 = vmatpush1.msra.mxu0 0.0
        %1372 = vmatprep.subr.mxu0 0.0
        %1373 = vmatpush1.msra.mxu0 0.0
        %1374 = vmatprep.subr.mxu0 0.0
        %1375 = vmatpush1.msra.mxu0 0.0
        %1376 = vmatprep.subr.mxu0 0.0
        %1377 = vmatpush1.msra.mxu0 0.0
        %1378 = vmatprep.subr.mxu0 0.0
        %1379 = vmatpush1.msra.mxu0 0.0
        %1380 = vmatprep.subr.mxu0 0.0
        %1381 = vmatpush1.msra.mxu0 0.0
        %1382 = vmatprep.subr.mxu0 0.0
        %1383 = vmatpush1.msra.mxu0 0.0
        %1384 = vmatprep.subr.mxu0 0.0
        %1385 = vmatpush1.msra.mxu0 0.0
        %1386 = vmatprep.subr.mxu0 0.0
        %1387 = vmatpush1.msra.mxu0 0.0
        %1388 = vmatprep.subr.mxu0 0.0
        %1389 = vmatpush1.msra.mxu0 0.0
        %1390 = vmatprep.subr.mxu0 0.0
        %1391 = vmatpush1.msra.mxu0 0.0
        %1392 = vmatprep.subr.mxu0 0.0
        %1393 = vmatpush1.msra.mxu0 0.0
        %1394 = vmatprep.subr.mxu0 0.0
        %1395 = vmatpush1.msra.mxu0 0.0
        %1396 = vmatprep.mubr.f32.mxu0 0.0
        %1397 = vmatmul.mubr.f32.gmra.mrb[0].mxu0 %v1230
        %v1398 = vpop.f32.mrb[0].mxu0
        %v1399 = vadd.f32 0.0, %v1398
        %v1400 = vpop.f32.mrb[0].mxu0
        %v1401 = vadd.f32 0.0, %v1400
        %1402 = vmatprep.mubr.f32.mxu0 0.0
        %1403 = vmatmul.mubr.f32.gmra.mrb[0].mxu0 %v1233
        %v1404 = vpop.f32.mrb[0].mxu0
        %v1405 = vadd.f32 0.0, %v1404
        %v1406 = vpop.f32.mrb[0].mxu0
        %v1407 = vadd.f32 0.0, %v1406
        %1408 = vmatprep.mubr.f32.mxu0 0.0
        %1409 = vmatmul.mubr.f32.gmra.mrb[0].mxu0 %v1236
        %v1410 = vpop.f32.mrb[0].mxu0
        %v1411 = vadd.f32 0.0, %v1410
        %v1412 = vpop.f32.mrb[0].mxu0
        %v1413 = vadd.f32 0.0, %v1412
        %1414 = vmatprep.mubr.f32.mxu0 0.0
        %1415 = vmatmul.mubr.f32.gmra.mrb[0].mxu0 %v1239
        %v1416 = vpop.f32.mrb[0].mxu0
        %v1417 = vadd.f32 0.0, %v1416
        %v1418 = vpop.f32.mrb[0].mxu0
        %v1419 = vadd.f32 0.0, %v1418
        %1420 = vmatprep.mubr.f32.mxu0 0.0
        %1421 = vmatmul.mubr.f32.gmra.mrb[0].mxu0 %v1242
        %v1422 = vpop.f32.mrb[0].mxu0
        %v1423 = vadd.f32 0.0, %v1422
        %v1424 = vpop.f32.mrb[0].mxu0
        %v1425 = vadd.f32 0.0, %v1424
        %1426 = vmatprep.mubr.f32.mxu0 0.0
        %1427 = vmatmul.mubr.f32.gmra.mrb[0].mxu0 %v1245
        %v1428 = vpop.f32.mrb[0].mxu0
        %v1429 = vadd.f32 0.0, %v1428
        %v1430 = vpop.f32.mrb[0].mxu0
        %v1431 = vadd.f32 0.0, %v1430
        %1432 = vmatprep.mubr.f32.mxu0 0.0
        %1433 = vmatmul.mubr.f32.gmra.mrb[0].mxu0 %v1248
        %v1434 = vpop.f32.mrb[0].mxu0
        %v1435 = vadd.f32 0.0, %v1434
        %v1436 = vpop.f32.mrb[0].mxu0
        %v1437 = vadd.f32 0.0, %v1436
        %1438 = vmatprep.mubr.f32.mxu0 0.0
        %1439 = vmatmul.mubr.f32.gmra.mrb[0].mxu0 %v1251
        %v1440 = vpop.f32.mrb[0].mxu0
        %v1441 = vadd.f32 0.0, %v1440
        %v1442 = vpop.f32.mrb[0].mxu0
        %v1443 = vadd.f32 0.0, %v1442
        %1444 = vmatprep.mubr.f32.mxu0 0.0
        %1445 = vmatmul.mubr.f32.gmra.mrb[0].mxu0 %v1254
        %v1446 = vpop.f32.mrb[0].mxu0
        %v1447 = vadd.f32 0.0, %v1446
        %v1448 = vpop.f32.mrb[0].mxu0
        %v1449 = vadd.f32 0.0, %v1448
        %1450 = vmatprep.mubr.f32.mxu0 0.0
        %1451 = vmatmul.mubr.f32.gmra.mrb[0].mxu0 %v1257
        %v1452 = vpop.f32.mrb[0].mxu0
        %v1453 = vadd.f32 0.0, %v1452
        %v1454 = vpop.f32.mrb[0].mxu0
        %v1455 = vadd.f32 0.0, %v1454
        %1456 = vmatprep.mubr.f32.mxu0 0.0
        %1457 = vmatmul.mubr.f32.gmra.mrb[0].mxu0 %v1260
        %v1458 = vpop.f32.mrb[0].mxu0
        %v1459 = vadd.f32 0.0, %v1458
        %v1460 = vpop.f32.mrb[0].mxu0
        %v1461 = vadd.f32 0.0, %v1460
        %1462 = vmatprep.mubr.f32.mxu0 0.0
        %1463 = vmatmul.mubr.f32.gmra.mrb[0].mxu0 %v1263
        %v1464 = vpop.f32.mrb[0].mxu0
        %v1465 = vadd.f32 0.0, %v1464
        %v1466 = vpop.f32.mrb[0].mxu0
        %v1467 = vadd.f32 0.0, %v1466
        %1468 = vmatprep.mubr.f32.mxu0 0.0
        %1469 = vmatmul.mubr.f32.gmra.mrb[0].mxu0 %v1266
        %v1470 = vpop.f32.mrb[0].mxu0
        %v1471 = vadd.f32 0.0, %v1470
        %v1472 = vpop.f32.mrb[0].mxu0
        %v1473 = vadd.f32 0.0, %v1472
        %1474 = vmatprep.mubr.f32.mxu0 0.0
        %1475 = vmatmul.mubr.f32.gmra.mrb[0].mxu0 %v1269
        %v1476 = vpop.f32.mrb[0].mxu0
        %v1477 = vadd.f32 0.0, %v1476
        %v1478 = vpop.f32.mrb[0].mxu0
        %v1479 = vadd.f32 0.0, %v1478
        %1480 = vmatprep.mubr.f32.mxu0 0.0
        %1481 = vmatmul.mubr.f32.gmra.mrb[0].mxu0 %v1272
        %v1482 = vpop.f32.mrb[0].mxu0
        %v1483 = vadd.f32 0.0, %v1482
        %v1484 = vpop.f32.mrb[0].mxu0
        %v1485 = vadd.f32 0.0, %v1484
        %1486 = vmatprep.mubr.f32.mxu0 0.0
        %1487 = vmatmul.mubr.f32.gmra.mrb[0].mxu0 %v1275
        %v1488 = vpop.f32.mrb[0].mxu0
        %v1489 = vadd.f32 0.0, %v1488
        %v1490 = vpop.f32.mrb[0].mxu0
        %v1491 = vadd.f32 0.0, %v1490
        %1492 = vmatprep.mubr.f32.mxu0 0.0
        %1493 = vmatmul.mubr.f32.gmra.mrb[0].mxu0 %v1278
        %v1494 = vpop.f32.mrb[0].mxu0
        %v1495 = vadd.f32 0.0, %v1494
        %v1496 = vpop.f32.mrb[0].mxu0
        %v1497 = vadd.f32 0.0, %v1496
        %1498 = vmatprep.mubr.f32.mxu0 0.0
        %1499 = vmatmul.mubr.f32.gmra.mrb[0].mxu0 %v1281
        %v1500 = vpop.f32.mrb[0].mxu0
        %v1501 = vadd.f32 0.0, %v1500
        %v1502 = vpop.f32.mrb[0].mxu0
        %v1503 = vadd.f32 0.0, %v1502
        %1504 = vmatprep.mubr.f32.mxu0 0.0
        %1505 = vmatmul.mubr.f32.gmra.mrb[0].mxu0 %v1284
        %v1506 = vpop.f32.mrb[0].mxu0
        %v1507 = vadd.f32 0.0, %v1506
        %v1508 = vpop.f32.mrb[0].mxu0
        %v1509 = vadd.f32 0.0, %v1508
        %1510 = vmatprep.mubr.f32.mxu0 0.0
        %1511 = vmatmul.mubr.f32.gmra.mrb[0].mxu0 %v1287
        %v1512 = vpop.f32.mrb[0].mxu0
        %v1513 = vadd.f32 0.0, %v1512
        %v1514 = vpop.f32.mrb[0].mxu0
        %v1515 = vadd.f32 0.0, %v1514
        %1516 = vmatprep.mubr.f32.mxu0 0.0
        %1517 = vmatmul.mubr.f32.gmra.mrb[0].mxu0 %v1290
        %v1518 = vpop.f32.mrb[0].mxu0
        %v1519 = vadd.f32 0.0, %v1518
        %v1520 = vpop.f32.mrb[0].mxu0
        %v1521 = vadd.f32 0.0, %v1520
        %1522 = vmatprep.mubr.f32.mxu0 0.0
        %1523 = vmatmul.mubr.f32.gmra.mrb[0].mxu0 %v1293
        %v1524 = vpop.f32.mrb[0].mxu0
        %v1525 = vadd.f32 0.0, %v1524
        %v1526 = vpop.f32.mrb[0].mxu0
        %v1527 = vadd.f32 0.0, %v1526
        %1528 = vmatprep.mubr.f32.mxu0 0.0
        %1529 = vmatmul.mubr.f32.gmra.mrb[0].mxu0 %v1296
        %v1530 = vpop.f32.mrb[0].mxu0
        %v1531 = vadd.f32 0.0, %v1530
        %v1532 = vpop.f32.mrb[0].mxu0
        %v1533 = vadd.f32 0.0, %v1532
        %1534 = vmatprep.mubr.f32.mxu0 0.0
        %1535 = vmatmul.mubr.f32.gmra.mrb[0].mxu0 %v1299
        %v1536 = vpop.f32.mrb[0].mxu0
        %v1537 = vadd.f32 0.0, %v1536
        %v1538 = vpop.f32.mrb[0].mxu0
        %v1539 = vadd.f32 0.0, %v1538
        %1540 = vmatprep.mubr.f32.mxu0 0.0
        %1541 = vmatmul.mubr.f32.gmra.mrb[0].mxu0 %v1302
        %v1542 = vpop.f32.mrb[0].mxu0
        %v1543 = vadd.f32 0.0, %v1542
        %v1544 = vpop.f32.mrb[0].mxu0
        %v1545 = vadd.f32 0.0, %v1544
        %1546 = vmatprep.mubr.f32.mxu0 0.0
        %1547 = vmatmul.mubr.f32.gmra.mrb[0].mxu0 %v1305
        %v1548 = vpop.f32.mrb[0].mxu0
        %v1549 = vadd.f32 0.0, %v1548
        %v1550 = vpop.f32.mrb[0].mxu0
        %v1551 = vadd.f32 0.0, %v1550
        %1552 = vmatprep.mubr.f32.mxu0 0.0
        %1553 = vmatmul.mubr.f32.gmra.mrb[0].mxu0 %v1308
        %v1554 = vpop.f32.mrb[0].mxu0
        %v1555 = vadd.f32 0.0, %v1554
        %v1556 = vpop.f32.mrb[0].mxu0
        %v1557 = vadd.f32 0.0, %v1556
        %1558 = vmatprep.mubr.f32.mxu0 0.0
        %1559 = vmatmul.mubr.f32.gmra.mrb[0].mxu0 %v1311
        %v1560 = vpop.f32.mrb[0].mxu0
        %v1561 = vadd.f32 0.0, %v1560
        %v1562 = vpop.f32.mrb[0].mxu0
        %v1563 = vadd.f32 0.0, %v1562
        %1564 = vmatprep.mubr.f32.mxu0 0.0
        %1565 = vmatmul.mubr.f32.gmra.mrb[0].mxu0 %v1314
        %v1566 = vpop.f32.mrb[0].mxu0
        %v1567 = vadd.f32 0.0, %v1566
        %v1568 = vpop.f32.mrb[0].mxu0
        %v1569 = vadd.f32 0.0, %v1568
        %1570 = vmatprep.mubr.f32.mxu0 0.0
        %1571 = vmatmul.mubr.f32.gmra.mrb[0].mxu0 %v1317
        %v1572 = vpop.f32.mrb[0].mxu0
        %v1573 = vadd.f32 0.0, %v1572
        %v1574 = vpop.f32.mrb[0].mxu0
        %v1575 = vadd.f32 0.0, %v1574
        %1576 = vmatprep.mubr.f32.mxu0 0.0
        %1577 = vmatmul.mubr.f32.gmra.mrb[0].mxu0 %v1320
        %v1578 = vpop.f32.mrb[0].mxu0
        %v1579 = vadd.f32 0.0, %v1578
        %v1580 = vpop.f32.mrb[0].mxu0
        %v1581 = vadd.f32 0.0, %v1580
        %1582 = vmatprep.mubr.f32.mxu0 0.0
        %1583 = vmatmul.mubr.f32.gmra.mrb[0].mxu0 %v1323
        %v1584 = vpop.f32.mrb[0].mxu0
        %v1585 = vadd.f32 0.0, %v1584
        %v1586 = vpop.f32.mrb[0].mxu0
        %v1587 = vadd.f32 0.0, %v1586
        %1588 = vdwg.mxu0
        %v1589 = vmax.f32 %v1399, %v1401
        %1590 = vmax.xlane.f32.xlu0 %v1589
        %v1591 = vpop.xlane.xlu0 %1590
        %v1592 = vmax.f32 %v1405, %v1407
        %1593 = vmax.xlane.f32.xlu0 %v1592
        %v1594 = vpop.xlane.xlu0 %1593
        %v1595 = vmax.f32 %v1411, %v1413
        %1596 = vmax.xlane.f32.xlu0 %v1595
        %v1597 = vpop.xlane.xlu0 %1596
        %v1598 = vmax.f32 %v1417, %v1419
        %1599 = vmax.xlane.f32.xlu0 %v1598
        %v1600 = vpop.xlane.xlu0 %1599
        %v1601 = vmax.f32 %v1423, %v1425
        %1602 = vmax.xlane.f32.xlu0 %v1601
        %v1603 = vpop.xlane.xlu0 %1602
        %v1604 = vmax.f32 %v1429, %v1431
        %1605 = vmax.xlane.f32.xlu0 %v1604
        %v1606 = vpop.xlane.xlu0 %1605
        %v1607 = vmax.f32 %v1435, %v1437
        %1608 = vmax.xlane.f32.xlu0 %v1607
        %v1609 = vpop.xlane.xlu0 %1608
        %v1610 = vmax.f32 %v1441, %v1443
        %1611 = vmax.xlane.f32.xlu0 %v1610
        %v1612 = vpop.xlane.xlu0 %1611
        %v1613 = vmax.f32 %v1447, %v1449
        %1614 = vmax.xlane.f32.xlu0 %v1613
        %v1615 = vpop.xlane.xlu0 %1614
        %v1616 = vmax.f32 %v1453, %v1455
        %1617 = vmax.xlane.f32.xlu0 %v1616
        %v1618 = vpop.xlane.xlu0 %1617
        %v1619 = vmax.f32 %v1459, %v1461
        %1620 = vmax.xlane.f32.xlu0 %v1619
        %v1621 = vpop.xlane.xlu0 %1620
        %v1622 = vmax.f32 %v1465, %v1467
        %1623 = vmax.xlane.f32.xlu0 %v1622
        %v1624 = vpop.xlane.xlu0 %1623
        %v1625 = vmax.f32 %v1471, %v1473
        %1626 = vmax.xlane.f32.xlu0 %v1625
        %v1627 = vpop.xlane.xlu0 %1626
        %v1628 = vmax.f32 %v1477, %v1479
        %1629 = vmax.xlane.f32.xlu0 %v1628
        %v1630 = vpop.xlane.xlu0 %1629
        %v1631 = vmax.f32 %v1483, %v1485
        %1632 = vmax.xlane.f32.xlu0 %v1631
        %v1633 = vpop.xlane.xlu0 %1632
        %v1634 = vmax.f32 %v1489, %v1491
        %1635 = vmax.xlane.f32.xlu0 %v1634
        %v1636 = vpop.xlane.xlu0 %1635
        %v1637 = vmax.f32 %v1495, %v1497
        %1638 = vmax.xlane.f32.xlu0 %v1637
        %v1639 = vpop.xlane.xlu0 %1638
        %v1640 = vmax.f32 %v1501, %v1503
        %1641 = vmax.xlane.f32.xlu0 %v1640
        %v1642 = vpop.xlane.xlu0 %1641
        %v1643 = vmax.f32 %v1507, %v1509
        %1644 = vmax.xlane.f32.xlu0 %v1643
        %v1645 = vpop.xlane.xlu0 %1644
        %v1646 = vmax.f32 %v1513, %v1515
        %1647 = vmax.xlane.f32.xlu0 %v1646
        %v1648 = vpop.xlane.xlu0 %1647
        %v1649 = vmax.f32 %v1519, %v1521
        %1650 = vmax.xlane.f32.xlu0 %v1649
        %v1651 = vpop.xlane.xlu0 %1650
        %v1652 = vmax.f32 %v1525, %v1527
        %1653 = vmax.xlane.f32.xlu0 %v1652
        %v1654 = vpop.xlane.xlu0 %1653
        %v1655 = vmax.f32 %v1531, %v1533
        %1656 = vmax.xlane.f32.xlu0 %v1655
        %v1657 = vpop.xlane.xlu0 %1656
        %v1658 = vmax.f32 %v1537, %v1539
        %1659 = vmax.xlane.f32.xlu0 %v1658
        %v1660 = vpop.xlane.xlu0 %1659
        %v1661 = vmax.f32 %v1543, %v1545
        %1662 = vmax.xlane.f32.xlu0 %v1661
        %v1663 = vpop.xlane.xlu0 %1662
        %v1664 = vmax.f32 %v1549, %v1551
        %1665 = vmax.xlane.f32.xlu0 %v1664
        %v1666 = vpop.xlane.xlu0 %1665
        %v1667 = vmax.f32 %v1555, %v1557
        %1668 = vmax.xlane.f32.xlu0 %v1667
        %v1669 = vpop.xlane.xlu0 %1668
        %v1670 = vmax.f32 %v1561, %v1563
        %1671 = vmax.xlane.f32.xlu0 %v1670
        %v1672 = vpop.xlane.xlu0 %1671
        %v1673 = vmax.f32 %v1567, %v1569
        %1674 = vmax.xlane.f32.xlu0 %v1673
        %v1675 = vpop.xlane.xlu0 %1674
        %v1676 = vmax.f32 %v1573, %v1575
        %1677 = vmax.xlane.f32.xlu0 %v1676
        %v1678 = vpop.xlane.xlu0 %1677
        %v1679 = vmax.f32 %v1579, %v1581
        %1680 = vmax.xlane.f32.xlu0 %v1679
        %v1681 = vpop.xlane.xlu0 %1680
        %v1682 = vmax.f32 %v1585, %v1587
        %1683 = vmax.xlane.f32.xlu0 %v1682
        %v1684 = vpop.xlane.xlu0 %1683
        %v1685 = vsub.f32 %v1399, %v1591
        %v1686 = vsub.f32 %v1401, %v1591
        %v1687 = vsub.f32 %v1405, %v1594
        %v1688 = vsub.f32 %v1407, %v1594
        %v1689 = vsub.f32 %v1411, %v1597
        %v1690 = vsub.f32 %v1413, %v1597
        %v1691 = vsub.f32 %v1417, %v1600
        %v1692 = vsub.f32 %v1419, %v1600
        %v1693 = vsub.f32 %v1423, %v1603
        %v1694 = vsub.f32 %v1425, %v1603
        %v1695 = vsub.f32 %v1429, %v1606
        %v1696 = vsub.f32 %v1431, %v1606
        %v1697 = vsub.f32 %v1435, %v1609
        %v1698 = vsub.f32 %v1437, %v1609
        %v1699 = vsub.f32 %v1441, %v1612
        %v1700 = vsub.f32 %v1443, %v1612
        %v1701 = vsub.f32 %v1447, %v1615
        %v1702 = vsub.f32 %v1449, %v1615
        %v1703 = vsub.f32 %v1453, %v1618
        %v1704 = vsub.f32 %v1455, %v1618
        %v1705 = vsub.f32 %v1459, %v1621
        %v1706 = vsub.f32 %v1461, %v1621
        %v1707 = vsub.f32 %v1465, %v1624
        %v1708 = vsub.f32 %v1467, %v1624
        %v1709 = vsub.f32 %v1471, %v1627
        %v1710 = vsub.f32 %v1473, %v1627
        %v1711 = vsub.f32 %v1477, %v1630
        %v1712 = vsub.f32 %v1479, %v1630
        %v1713 = vsub.f32 %v1483, %v1633
        %v1714 = vsub.f32 %v1485, %v1633
        %v1715 = vsub.f32 %v1489, %v1636
        %v1716 = vsub.f32 %v1491, %v1636
        %v1717 = vsub.f32 %v1495, %v1639
        %v1718 = vsub.f32 %v1497, %v1639
        %v1719 = vsub.f32 %v1501, %v1642
        %v1720 = vsub.f32 %v1503, %v1642
        %v1721 = vsub.f32 %v1507, %v1645
        %v1722 = vsub.f32 %v1509, %v1645
        %v1723 = vsub.f32 %v1513, %v1648
        %v1724 = vsub.f32 %v1515, %v1648
        %v1725 = vsub.f32 %v1519, %v1651
        %v1726 = vsub.f32 %v1521, %v1651
        %v1727 = vsub.f32 %v1525, %v1654
        %v1728 = vsub.f32 %v1527, %v1654
        %v1729 = vsub.f32 %v1531, %v1657
        %v1730 = vsub.f32 %v1533, %v1657
        %v1731 = vsub.f32 %v1537, %v1660
        %v1732 = vsub.f32 %v1539, %v1660
        %v1733 = vsub.f32 %v1543, %v1663
        %v1734 = vsub.f32 %v1545, %v1663
        %v1735 = vsub.f32 %v1549, %v1666
        %v1736 = vsub.f32 %v1551, %v1666
        %v1737 = vsub.f32 %v1555, %v1669
        %v1738 = vsub.f32 %v1557, %v1669
        %v1739 = vsub.f32 %v1561, %v1672
        %v1740 = vsub.f32 %v1563, %v1672
        %v1741 = vsub.f32 %v1567, %v1675
        %v1742 = vsub.f32 %v1569, %v1675
        %v1743 = vsub.f32 %v1573, %v1678
        %v1744 = vsub.f32 %v1575, %v1678
        %v1745 = vsub.f32 %v1579, %v1681
        %v1746 = vsub.f32 %v1581, %v1681
        %v1747 = vsub.f32 %v1585, %v1684
        %v1748 = vsub.f32 %v1587, %v1684
        %v1749 = vmul.f32 %v1685, 1.442695
        %v1750 = vpow.pop %v1749
        %v1751 = vmul.f32 %v1686, 1.442695
        %v1752 = vpow.pop %v1751
        %v1753 = vmul.f32 %v1687, 1.442695
        %v1754 = vpow.pop %v1753
        %v1755 = vmul.f32 %v1688, 1.442695
        %v1756 = vpow.pop %v1755
        %v1757 = vmul.f32 %v1689, 1.442695
        %v1758 = vpow.pop %v1757
        %v1759 = vmul.f32 %v1690, 1.442695
        %v1760 = vpow.pop %v1759
        %v1761 = vmul.f32 %v1691, 1.442695
        %v1762 = vpow.pop %v1761
        %v1763 = vmul.f32 %v1692, 1.442695
        %v1764 = vpow.pop %v1763
        %v1765 = vmul.f32 %v1693, 1.442695
        %v1766 = vpow.pop %v1765
        %v1767 = vmul.f32 %v1694, 1.442695
        %v1768 = vpow.pop %v1767
        %v1769 = vmul.f32 %v1695, 1.442695
        %v1770 = vpow.pop %v1769
        %v1771 = vmul.f32 %v1696, 1.442695
        %v1772 = vpow.pop %v1771
        %v1773 = vmul.f32 %v1697, 1.442695
        %v1774 = vpow.pop %v1773
        %v1775 = vmul.f32 %v1698, 1.442695
        %v1776 = vpow.pop %v1775
        %v1777 = vmul.f32 %v1699, 1.442695
        %v1778 = vpow.pop %v1777
        %v1779 = vmul.f32 %v1700, 1.442695
        %v1780 = vpow.pop %v1779
        %v1781 = vmul.f32 %v1701, 1.442695
        %v1782 = vpow.pop %v1781
        %v1783 = vmul.f32 %v1702, 1.442695
        %v1784 = vpow.pop %v1783
        %v1785 = vmul.f32 %v1703, 1.442695
        %v1786 = vpow.pop %v1785
        %v1787 = vmul.f32 %v1704, 1.442695
        %v1788 = vpow.pop %v1787
        %v1789 = vmul.f32 %v1705, 1.442695
        %v1790 = vpow.pop %v1789
        %v1791 = vmul.f32 %v1706, 1.442695
        %v1792 = vpow.pop %v1791
        %v1793 = vmul.f32 %v1707, 1.442695
        %v1794 = vpow.pop %v1793
        %v1795 = vmul.f32 %v1708, 1.442695
        %v1796 = vpow.pop %v1795
        %v1797 = vmul.f32 %v1709, 1.442695
        %v1798 = vpow.pop %v1797
        %v1799 = vmul.f32 %v1710, 1.442695
        %v1800 = vpow.pop %v1799
        %v1801 = vmul.f32 %v1711, 1.442695
        %v1802 = vpow.pop %v1801
        %v1803 = vmul.f32 %v1712, 1.442695
        %v1804 = vpow.pop %v1803
        %v1805 = vmul.f32 %v1713, 1.442695
        %v1806 = vpow.pop %v1805
        %v1807 = vmul.f32 %v1714, 1.442695
        %v1808 = vpow.pop %v1807
        %v1809 = vmul.f32 %v1715, 1.442695
        %v1810 = vpow.pop %v1809
        %v1811 = vmul.f32 %v1716, 1.442695
        %v1812 = vpow.pop %v1811
        %v1813 = vmul.f32 %v1717, 1.442695
        %v1814 = vpow.pop %v1813
        %v1815 = vmul.f32 %v1718, 1.442695
        %v1816 = vpow.pop %v1815
        %v1817 = vmul.f32 %v1719, 1.442695
        %v1818 = vpow.pop %v1817
        %v1819 = vmul.f32 %v1720, 1.442695
        %v1820 = vpow.pop %v1819
        %v1821 = vmul.f32 %v1721, 1.442695
        %v1822 = vpow.pop %v1821
        %v1823 = vmul.f32 %v1722, 1.442695
        %v1824 = vpow.pop %v1823
        %v1825 = vmul.f32 %v1723, 1.442695
        %v1826 = vpow.pop %v1825
        %v1827 = vmul.f32 %v1724, 1.442695
        %v1828 = vpow.pop %v1827
        %v1829 = vmul.f32 %v1725, 1.442695
        %v1830 = vpow.pop %v1829
        %v1831 = vmul.f32 %v1726, 1.442695
        %v1832 = vpow.pop %v1831
        %v1833 = vmul.f32 %v1727, 1.442695
        %v1834 = vpow.pop %v1833
        %v1835 = vmul.f32 %v1728, 1.442695
        %v1836 = vpow.pop %v1835
        %v1837 = vmul.f32 %v1729, 1.442695
        %v1838 = vpow.pop %v1837
        %v1839 = vmul.f32 %v1730, 1.442695
        %v1840 = vpow.pop %v1839
        %v1841 = vmul.f32 %v1731, 1.442695
        %v1842 = vpow.pop %v1841
        %v1843 = vmul.f32 %v1732, 1.442695
        %v1844 = vpow.pop %v1843
        %v1845 = vmul.f32 %v1733, 1.442695
        %v1846 = vpow.pop %v1845
        %v1847 = vmul.f32 %v1734, 1.442695
        %v1848 = vpow.pop %v1847
        %v1849 = vmul.f32 %v1735, 1.442695
        %v1850 = vpow.pop %v1849
        %v1851 = vmul.f32 %v1736, 1.442695
        %v1852 = vpow.pop %v1851
        %v1853 = vmul.f32 %v1737, 1.442695
        %v1854 = vpow.pop %v1853
        %v1855 = vmul.f32 %v1738, 1.442695
        %v1856 = vpow.pop %v1855
        %v1857 = vmul.f32 %v1739, 1.442695
        %v1858 = vpow.pop %v1857
        %v1859 = vmul.f32 %v1740, 1.442695
        %v1860 = vpow.pop %v1859
        %v1861 = vmul.f32 %v1741, 1.442695
        %v1862 = vpow.pop %v1861
        %v1863 = vmul.f32 %v1742, 1.442695
        %v1864 = vpow.pop %v1863
        %v1865 = vmul.f32 %v1743, 1.442695
        %v1866 = vpow.pop %v1865
        %v1867 = vmul.f32 %v1744, 1.442695
        %v1868 = vpow.pop %v1867
        %v1869 = vmul.f32 %v1745, 1.442695
        %v1870 = vpow.pop %v1869
        %v1871 = vmul.f32 %v1746, 1.442695
        %v1872 = vpow.pop %v1871
        %v1873 = vmul.f32 %v1747, 1.442695
        %v1874 = vpow.pop %v1873
        %v1875 = vmul.f32 %v1748, 1.442695
        %v1876 = vpow.pop %v1875
        %v1877 = vadd.f32 %v1750, %v1752
        %1878 = vadd.xlane.f32.xlu0 %v1877
        %v1879 = vpop.xlane.xlu0 %1878
        %v1880 = vadd.f32 %v1754, %v1756
        %1881 = vadd.xlane.f32.xlu0 %v1880
        %v1882 = vpop.xlane.xlu0 %1881
        %v1883 = vadd.f32 %v1758, %v1760
        %1884 = vadd.xlane.f32.xlu0 %v1883
        %v1885 = vpop.xlane.xlu0 %1884
        %v1886 = vadd.f32 %v1762, %v1764
        %1887 = vadd.xlane.f32.xlu0 %v1886
        %v1888 = vpop.xlane.xlu0 %1887
        %v1889 = vadd.f32 %v1766, %v1768
        %1890 = vadd.xlane.f32.xlu0 %v1889
        %v1891 = vpop.xlane.xlu0 %1890
        %v1892 = vadd.f32 %v1770, %v1772
        %1893 = vadd.xlane.f32.xlu0 %v1892
        %v1894 = vpop.xlane.xlu0 %1893
        %v1895 = vadd.f32 %v1774, %v1776
        %1896 = vadd.xlane.f32.xlu0 %v1895
        %v1897 = vpop.xlane.xlu0 %1896
        %v1898 = vadd.f32 %v1778, %v1780
        %1899 = vadd.xlane.f32.xlu0 %v1898
        %v1900 = vpop.xlane.xlu0 %1899
        %v1901 = vadd.f32 %v1782, %v1784
        %1902 = vadd.xlane.f32.xlu0 %v1901
        %v1903 = vpop.xlane.xlu0 %1902
        %v1904 = vadd.f32 %v1786, %v1788
        %1905 = vadd.xlane.f32.xlu0 %v1904
        %v1906 = vpop.xlane.xlu0 %1905
        %v1907 = vadd.f32 %v1790, %v1792
        %1908 = vadd.xlane.f32.xlu0 %v1907
        %v1909 = vpop.xlane.xlu0 %1908
        %v1910 = vadd.f32 %v1794, %v1796
        %1911 = vadd.xlane.f32.xlu0 %v1910
        %v1912 = vpop.xlane.xlu0 %1911
        %v1913 = vadd.f32 %v1798, %v1800
        %1914 = vadd.xlane.f32.xlu0 %v1913
        %v1915 = vpop.xlane.xlu0 %1914
        %v1916 = vadd.f32 %v1802, %v1804
        %1917 = vadd.xlane.f32.xlu0 %v1916
        %v1918 = vpop.xlane.xlu0 %1917
        %v1919 = vadd.f32 %v1806, %v1808
        %1920 = vadd.xlane.f32.xlu0 %v1919
        %v1921 = vpop.xlane.xlu0 %1920
        %v1922 = vadd.f32 %v1810, %v1812
        %1923 = vadd.xlane.f32.xlu0 %v1922
        %v1924 = vpop.xlane.xlu0 %1923
        %v1925 = vadd.f32 %v1814, %v1816
        %1926 = vadd.xlane.f32.xlu0 %v1925
        %v1927 = vpop.xlane.xlu0 %1926
        %v1928 = vadd.f32 %v1818, %v1820
        %1929 = vadd.xlane.f32.xlu0 %v1928
        %v1930 = vpop.xlane.xlu0 %1929
        %v1931 = vadd.f32 %v1822, %v1824
        %1932 = vadd.xlane.f32.xlu0 %v1931
        %v1933 = vpop.xlane.xlu0 %1932
        %v1934 = vadd.f32 %v1826, %v1828
        %1935 = vadd.xlane.f32.xlu0 %v1934
        %v1936 = vpop.xlane.xlu0 %1935
        %v1937 = vadd.f32 %v1830, %v1832
        %1938 = vadd.xlane.f32.xlu0 %v1937
        %v1939 = vpop.xlane.xlu0 %1938
        %v1940 = vadd.f32 %v1834, %v1836
        %1941 = vadd.xlane.f32.xlu0 %v1940
        %v1942 = vpop.xlane.xlu0 %1941
        %v1943 = vadd.f32 %v1838, %v1840
        %1944 = vadd.xlane.f32.xlu0 %v1943
        %v1945 = vpop.xlane.xlu0 %1944
        %v1946 = vadd.f32 %v1842, %v1844
        %1947 = vadd.xlane.f32.xlu0 %v1946
        %v1948 = vpop.xlane.xlu0 %1947
        %v1949 = vadd.f32 %v1846, %v1848
        %1950 = vadd.xlane.f32.xlu0 %v1949
        %v1951 = vpop.xlane.xlu0 %1950
        %v1952 = vadd.f32 %v1850, %v1852
        %1953 = vadd.xlane.f32.xlu0 %v1952
        %v1954 = vpop.xlane.xlu0 %1953
        %v1955 = vadd.f32 %v1854, %v1856
        %1956 = vadd.xlane.f32.xlu0 %v1955
        %v1957 = vpop.xlane.xlu0 %1956
        %v1958 = vadd.f32 %v1858, %v1860
        %1959 = vadd.xlane.f32.xlu0 %v1958
        %v1960 = vpop.xlane.xlu0 %1959
        %v1961 = vadd.f32 %v1862, %v1864
        %1962 = vadd.xlane.f32.xlu0 %v1961
        %v1963 = vpop.xlane.xlu0 %1962
        %v1964 = vadd.f32 %v1866, %v1868
        %1965 = vadd.xlane.f32.xlu0 %v1964
        %v1966 = vpop.xlane.xlu0 %1965
        %v1967 = vadd.f32 %v1870, %v1872
        %1968 = vadd.xlane.f32.xlu0 %v1967
        %v1969 = vpop.xlane.xlu0 %1968
        %v1970 = vadd.f32 %v1874, %v1876
        %1971 = vadd.xlane.f32.xlu0 %v1970
        %v1972 = vpop.xlane.xlu0 %1971
        %v1973 = vrcp.pop %v1879
        %v1974 = vrcp.pop %v1882
        %v1975 = vrcp.pop %v1885
        %v1976 = vrcp.pop %v1888
        %v1977 = vrcp.pop %v1891
        %v1978 = vrcp.pop %v1894
        %v1979 = vrcp.pop %v1897
        %v1980 = vrcp.pop %v1900
        %v1981 = vrcp.pop %v1903
        %v1982 = vrcp.pop %v1906
        %v1983 = vrcp.pop %v1909
        %v1984 = vrcp.pop %v1912
        %v1985 = vrcp.pop %v1915
        %v1986 = vrcp.pop %v1918
        %v1987 = vrcp.pop %v1921
        %v1988 = vrcp.pop %v1924
        %v1989 = vrcp.pop %v1927
        %v1990 = vrcp.pop %v1930
        %v1991 = vrcp.pop %v1933
        %v1992 = vrcp.pop %v1936
        %v1993 = vrcp.pop %v1939
        %v1994 = vrcp.pop %v1942
        %v1995 = vrcp.pop %v1945
        %v1996 = vrcp.pop %v1948
        %v1997 = vrcp.pop %v1951
        %v1998 = vrcp.pop %v1954
        %v1999 = vrcp.pop %v1957
        %v2000 = vrcp.pop %v1960
        %v2001 = vrcp.pop %v1963
        %v2002 = vrcp.pop %v1966
        %v2003 = vrcp.pop %v1969
        %v2004 = vrcp.pop %v1972
        %v2005 = vmul.f32 %v1750, %v1973
        %v2006 = vmul.f32 %v1752, %v1973
        %v2007 = vmul.f32 %v1754, %v1974
        %v2008 = vmul.f32 %v1756, %v1974
        %v2009 = vmul.f32 %v1758, %v1975
        %v2010 = vmul.f32 %v1760, %v1975
        %v2011 = vmul.f32 %v1762, %v1976
        %v2012 = vmul.f32 %v1764, %v1976
        %v2013 = vmul.f32 %v1766, %v1977
        %v2014 = vmul.f32 %v1768, %v1977
        %v2015 = vmul.f32 %v1770, %v1978
        %v2016 = vmul.f32 %v1772, %v1978
        %v2017 = vmul.f32 %v1774, %v1979
        %v2018 = vmul.f32 %v1776, %v1979
        %v2019 = vmul.f32 %v1778, %v1980
        %v2020 = vmul.f32 %v1780, %v1980
        %v2021 = vmul.f32 %v1782, %v1981
        %v2022 = vmul.f32 %v1784, %v1981
        %v2023 = vmul.f32 %v1786, %v1982
        %v2024 = vmul.f32 %v1788, %v1982
        %v2025 = vmul.f32 %v1790, %v1983
        %v2026 = vmul.f32 %v1792, %v1983
        %v2027 = vmul.f32 %v1794, %v1984
        %v2028 = vmul.f32 %v1796, %v1984
        %v2029 = vmul.f32 %v1798, %v1985
        %v2030 = vmul.f32 %v1800, %v1985
        %v2031 = vmul.f32 %v1802, %v1986
        %v2032 = vmul.f32 %v1804, %v1986
        %v2033 = vmul.f32 %v1806, %v1987
        %v2034 = vmul.f32 %v1808, %v1987
        %v2035 = vmul.f32 %v1810, %v1988
        %v2036 = vmul.f32 %v1812, %v1988
        %v2037 = vmul.f32 %v1814, %v1989
        %v2038 = vmul.f32 %v1816, %v1989
        %v2039 = vmul.f32 %v1818, %v1990
        %v2040 = vmul.f32 %v1820, %v1990
        %v2041 = vmul.f32 %v1822, %v1991
        %v2042 = vmul.f32 %v1824, %v1991
        %v2043 = vmul.f32 %v1826, %v1992
        %v2044 = vmul.f32 %v1828, %v1992
        %v2045 = vmul.f32 %v1830, %v1993
        %v2046 = vmul.f32 %v1832, %v1993
        %v2047 = vmul.f32 %v1834, %v1994
        %v2048 = vmul.f32 %v1836, %v1994
        %v2049 = vmul.f32 %v1838, %v1995
        %v2050 = vmul.f32 %v1840, %v1995
        %v2051 = vmul.f32 %v1842, %v1996
        %v2052 = vmul.f32 %v1844, %v1996
        %v2053 = vmul.f32 %v1846, %v1997
        %v2054 = vmul.f32 %v1848, %v1997
        %v2055 = vmul.f32 %v1850, %v1998
        %v2056 = vmul.f32 %v1852, %v1998
        %v2057 = vmul.f32 %v1854, %v1999
        %v2058 = vmul.f32 %v1856, %v1999
        %v2059 = vmul.f32 %v1858, %v2000
        %v2060 = vmul.f32 %v1860, %v2000
        %v2061 = vmul.f32 %v1862, %v2001
        %v2062 = vmul.f32 %v1864, %v2001
        %v2063 = vmul.f32 %v1866, %v2002
        %v2064 = vmul.f32 %v1868, %v2002
        %v2065 = vmul.f32 %v1870, %v2003
        %v2066 = vmul.f32 %v1872, %v2003
        %v2067 = vmul.f32 %v1874, %v2004
        %v2068 = vmul.f32 %v1876, %v2004
        %2069 = vmatprep.subr.mxu0 0.0
        %2070 = vmatpush1.msra.mxu0 %v1070
        %2071 = vmatprep.subr.mxu0 0.0
        %2072 = vmatpush1.msra.mxu0 %v1075
        %2073 = vmatprep.subr.mxu0 0.0
        %2074 = vmatpush1.msra.mxu0 %v1080
        %2075 = vmatprep.subr.mxu0 0.0
        %2076 = vmatpush1.msra.mxu0 %v1085
        %2077 = vmatprep.subr.mxu0 0.0
        %2078 = vmatpush1.msra.mxu0 %v1090
        %2079 = vmatprep.subr.mxu0 0.0
        %2080 = vmatpush1.msra.mxu0 %v1095
        %2081 = vmatprep.subr.mxu0 0.0
        %2082 = vmatpush1.msra.mxu0 %v1100
        %2083 = vmatprep.subr.mxu0 0.0
        %2084 = vmatpush1.msra.mxu0 %v1105
        %2085 = vmatprep.subr.mxu0 0.0
        %2086 = vmatpush1.msra.mxu0 %v1110
        %2087 = vmatprep.subr.mxu0 0.0
        %2088 = vmatpush1.msra.mxu0 %v1115
        %2089 = vmatprep.subr.mxu0 0.0
        %2090 = vmatpush1.msra.mxu0 %v1120
        %2091 = vmatprep.subr.mxu0 0.0
        %2092 = vmatpush1.msra.mxu0 %v1125
        %2093 = vmatprep.subr.mxu0 0.0
        %2094 = vmatpush1.msra.mxu0 %v1130
        %2095 = vmatprep.subr.mxu0 0.0
        %2096 = vmatpush1.msra.mxu0 %v1135
        %2097 = vmatprep.subr.mxu0 0.0
        %2098 = vmatpush1.msra.mxu0 %v1140
        %2099 = vmatprep.subr.mxu0 0.0
        %2100 = vmatpush1.msra.mxu0 %v1145
        %2101 = vmatprep.subr.mxu0 0.0
        %2102 = vmatpush1.msra.mxu0 %v1150
        %2103 = vmatprep.subr.mxu0 0.0
        %2104 = vmatpush1.msra.mxu0 %v1155
        %2105 = vmatprep.subr.mxu0 0.0
        %2106 = vmatpush1.msra.mxu0 %v1160
        %2107 = vmatprep.subr.mxu0 0.0
        %2108 = vmatpush1.msra.mxu0 %v1165
        %2109 = vmatprep.subr.mxu0 0.0
        %2110 = vmatpush1.msra.mxu0 %v1170
        %2111 = vmatprep.subr.mxu0 0.0
        %2112 = vmatpush1.msra.mxu0 %v1175
        %2113 = vmatprep.subr.mxu0 0.0
        %2114 = vmatpush1.msra.mxu0 %v1180
        %2115 = vmatprep.subr.mxu0 0.0
        %2116 = vmatpush1.msra.mxu0 %v1185
        %2117 = vmatprep.subr.mxu0 0.0
        %2118 = vmatpush1.msra.mxu0 %v1190
        %2119 = vmatprep.subr.mxu0 0.0
        %2120 = vmatpush1.msra.mxu0 %v1195
        %2121 = vmatprep.subr.mxu0 0.0
        %2122 = vmatpush1.msra.mxu0 %v1200
        %2123 = vmatprep.subr.mxu0 0.0
        %2124 = vmatpush1.msra.mxu0 %v1205
        %2125 = vmatprep.subr.mxu0 0.0
        %2126 = vmatpush1.msra.mxu0 %v1210
        %2127 = vmatprep.subr.mxu0 0.0
        %2128 = vmatpush1.msra.mxu0 %v1215
        %2129 = vmatprep.subr.mxu0 0.0
        %2130 = vmatpush1.msra.mxu0 %v1220
        %2131 = vmatprep.subr.mxu0 0.0
        %2132 = vmatpush1.msra.mxu0 %v1225
        %2133 = vmatprep.mubr.f32.mxu0 %v2006
        %2134 = vmatmul.mubr.f32.gmra.mrb[0].mxu0 %v2005
        %v2135 = vpop.f32.mrb[0].mxu0
        %v2136 = vadd.f32 0.0, %v2135
        %v2137 = vpop.f32.mrb[0].mxu0
        %2138 = vmatprep.mubr.f32.mxu0 %v2008
        %2139 = vmatmul.mubr.f32.gmra.mrb[0].mxu0 %v2007
        %v2140 = vpop.f32.mrb[0].mxu0
        %v2141 = vadd.f32 0.0, %v2140
        %v2142 = vpop.f32.mrb[0].mxu0
        %2143 = vmatprep.mubr.f32.mxu0 %v2010
        %2144 = vmatmul.mubr.f32.gmra.mrb[0].mxu0 %v2009
        %v2145 = vpop.f32.mrb[0].mxu0
        %v2146 = vadd.f32 0.0, %v2145
        %v2147 = vpop.f32.mrb[0].mxu0
        %2148 = vmatprep.mubr.f32.mxu0 %v2012
        %2149 = vmatmul.mubr.f32.gmra.mrb[0].mxu0 %v2011
        %v2150 = vpop.f32.mrb[0].mxu0
        %v2151 = vadd.f32 0.0, %v2150
        %v2152 = vpop.f32.mrb[0].mxu0
        %2153 = vmatprep.mubr.f32.mxu0 %v2014
        %2154 = vmatmul.mubr.f32.gmra.mrb[0].mxu0 %v2013
        %v2155 = vpop.f32.mrb[0].mxu0
        %v2156 = vadd.f32 0.0, %v2155
        %v2157 = vpop.f32.mrb[0].mxu0
        %2158 = vmatprep.mubr.f32.mxu0 %v2016
        %2159 = vmatmul.mubr.f32.gmra.mrb[0].mxu0 %v2015
        %v2160 = vpop.f32.mrb[0].mxu0
        %v2161 = vadd.f32 0.0, %v2160
        %v2162 = vpop.f32.mrb[0].mxu0
        %2163 = vmatprep.mubr.f32.mxu0 %v2018
        %2164 = vmatmul.mubr.f32.gmra.mrb[0].mxu0 %v2017
        %v2165 = vpop.f32.mrb[0].mxu0
        %v2166 = vadd.f32 0.0, %v2165
        %v2167 = vpop.f32.mrb[0].mxu0
        %2168 = vmatprep.mubr.f32.mxu0 %v2020
        %2169 = vmatmul.mubr.f32.gmra.mrb[0].mxu0 %v2019
        %v2170 = vpop.f32.mrb[0].mxu0
        %v2171 = vadd.f32 0.0, %v2170
        %v2172 = vpop.f32.mrb[0].mxu0
        %2173 = vmatprep.mubr.f32.mxu0 %v2022
        %2174 = vmatmul.mubr.f32.gmra.mrb[0].mxu0 %v2021
        %v2175 = vpop.f32.mrb[0].mxu0
        %v2176 = vadd.f32 0.0, %v2175
        %v2177 = vpop.f32.mrb[0].mxu0
        %2178 = vmatprep.mubr.f32.mxu0 %v2024
        %2179 = vmatmul.mubr.f32.gmra.mrb[0].mxu0 %v2023
        %v2180 = vpop.f32.mrb[0].mxu0
        %v2181 = vadd.f32 0.0, %v2180
        %v2182 = vpop.f32.mrb[0].mxu0
        %2183 = vmatprep.mubr.f32.mxu0 %v2026
        %2184 = vmatmul.mubr.f32.gmra.mrb[0].mxu0 %v2025
        %v2185 = vpop.f32.mrb[0].mxu0
        %v2186 = vadd.f32 0.0, %v2185
        %v2187 = vpop.f32.mrb[0].mxu0
        %2188 = vmatprep.mubr.f32.mxu0 %v2028
        %2189 = vmatmul.mubr.f32.gmra.mrb[0].mxu0 %v2027
        %v2190 = vpop.f32.mrb[0].mxu0
        %v2191 = vadd.f32 0.0, %v2190
        %v2192 = vpop.f32.mrb[0].mxu0
        %2193 = vmatprep.mubr.f32.mxu0 %v2030
        %2194 = vmatmul.mubr.f32.gmra.mrb[0].mxu0 %v2029
        %v2195 = vpop.f32.mrb[0].mxu0
        %v2196 = vadd.f32 0.0, %v2195
        %v2197 = vpop.f32.mrb[0].mxu0
        %2198 = vmatprep.mubr.f32.mxu0 %v2032
        %2199 = vmatmul.mubr.f32.gmra.mrb[0].mxu0 %v2031
        %v2200 = vpop.f32.mrb[0].mxu0
        %v2201 = vadd.f32 0.0, %v2200
        %v2202 = vpop.f32.mrb[0].mxu0
        %2203 = vmatprep.mubr.f32.mxu0 %v2034
        %2204 = vmatmul.mubr.f32.gmra.mrb[0].mxu0 %v2033
        %v2205 = vpop.f32.mrb[0].mxu0
        %v2206 = vadd.f32 0.0, %v2205
        %v2207 = vpop.f32.mrb[0].mxu0
        %2208 = vmatprep.mubr.f32.mxu0 %v2036
        %2209 = vmatmul.mubr.f32.gmra.mrb[0].mxu0 %v2035
        %v2210 = vpop.f32.mrb[0].mxu0
        %v2211 = vadd.f32 0.0, %v2210
        %v2212 = vpop.f32.mrb[0].mxu0
        %2213 = vmatprep.mubr.f32.mxu0 %v2038
        %2214 = vmatmul.mubr.f32.gmra.mrb[0].mxu0 %v2037
        %v2215 = vpop.f32.mrb[0].mxu0
        %v2216 = vadd.f32 0.0, %v2215
        %v2217 = vpop.f32.mrb[0].mxu0
        %2218 = vmatprep.mubr.f32.mxu0 %v2040
        %2219 = vmatmul.mubr.f32.gmra.mrb[0].mxu0 %v2039
        %v2220 = vpop.f32.mrb[0].mxu0
        %v2221 = vadd.f32 0.0, %v2220
        %v2222 = vpop.f32.mrb[0].mxu0
        %2223 = vmatprep.mubr.f32.mxu0 %v2042
        %2224 = vmatmul.mubr.f32.gmra.mrb[0].mxu0 %v2041
        %v2225 = vpop.f32.mrb[0].mxu0
        %v2226 = vadd.f32 0.0, %v2225
        %v2227 = vpop.f32.mrb[0].mxu0
        %2228 = vmatprep.mubr.f32.mxu0 %v2044
        %2229 = vmatmul.mubr.f32.gmra.mrb[0].mxu0 %v2043
        %v2230 = vpop.f32.mrb[0].mxu0
        %v2231 = vadd.f32 0.0, %v2230
        %v2232 = vpop.f32.mrb[0].mxu0
        %2233 = vmatprep.mubr.f32.mxu0 %v2046
        %2234 = vmatmul.mubr.f32.gmra.mrb[0].mxu0 %v2045
        %v2235 = vpop.f32.mrb[0].mxu0
        %v2236 = vadd.f32 0.0, %v2235
        %v2237 = vpop.f32.mrb[0].mxu0
        %2238 = vmatprep.mubr.f32.mxu0 %v2048
        %2239 = vmatmul.mubr.f32.gmra.mrb[0].mxu0 %v2047
        %v2240 = vpop.f32.mrb[0].mxu0
        %v2241 = vadd.f32 0.0, %v2240
        %v2242 = vpop.f32.mrb[0].mxu0
        %2243 = vmatprep.mubr.f32.mxu0 %v2050
        %2244 = vmatmul.mubr.f32.gmra.mrb[0].mxu0 %v2049
        %v2245 = vpop.f32.mrb[0].mxu0
        %v2246 = vadd.f32 0.0, %v2245
        %v2247 = vpop.f32.mrb[0].mxu0
        %2248 = vmatprep.mubr.f32.mxu0 %v2052
        %2249 = vmatmul.mubr.f32.gmra.mrb[0].mxu0 %v2051
        %v2250 = vpop.f32.mrb[0].mxu0
        %v2251 = vadd.f32 0.0, %v2250
        %v2252 = vpop.f32.mrb[0].mxu0
        %2253 = vmatprep.mubr.f32.mxu0 %v2054
        %2254 = vmatmul.mubr.f32.gmra.mrb[0].mxu0 %v2053
        %v2255 = vpop.f32.mrb[0].mxu0
        %v2256 = vadd.f32 0.0, %v2255
        %v2257 = vpop.f32.mrb[0].mxu0
        %2258 = vmatprep.mubr.f32.mxu0 %v2056
        %2259 = vmatmul.mubr.f32.gmra.mrb[0].mxu0 %v2055
        %v2260 = vpop.f32.mrb[0].mxu0
        %v2261 = vadd.f32 0.0, %v2260
        %v2262 = vpop.f32.mrb[0].mxu0
        %2263 = vmatprep.mubr.f32.mxu0 %v2058
        %2264 = vmatmul.mubr.f32.gmra.mrb[0].mxu0 %v2057
        %v2265 = vpop.f32.mrb[0].mxu0
        %v2266 = vadd.f32 0.0, %v2265
        %v2267 = vpop.f32.mrb[0].mxu0
        %2268 = vmatprep.mubr.f32.mxu0 %v2060
        %2269 = vmatmul.mubr.f32.gmra.mrb[0].mxu0 %v2059
        %v2270 = vpop.f32.mrb[0].mxu0
        %v2271 = vadd.f32 0.0, %v2270
        %v2272 = vpop.f32.mrb[0].mxu0
        %2273 = vmatprep.mubr.f32.mxu0 %v2062
        %2274 = vmatmul.mubr.f32.gmra.mrb[0].mxu0 %v2061
        %v2275 = vpop.f32.mrb[0].mxu0
        %v2276 = vadd.f32 0.0, %v2275
        %v2277 = vpop.f32.mrb[0].mxu0
        %2278 = vmatprep.mubr.f32.mxu0 %v2064
        %2279 = vmatmul.mubr.f32.gmra.mrb[0].mxu0 %v2063
        %v2280 = vpop.f32.mrb[0].mxu0
        %v2281 = vadd.f32 0.0, %v2280
        %v2282 = vpop.f32.mrb[0].mxu0
        %2283 = vmatprep.mubr.f32.mxu0 %v2066
        %2284 = vmatmul.mubr.f32.gmra.mrb[0].mxu0 %v2065
        %v2285 = vpop.f32.mrb[0].mxu0
        %v2286 = vadd.f32 0.0, %v2285
        %v2287 = vpop.f32.mrb[0].mxu0
        %2288 = vmatprep.mubr.f32.mxu0 %v2068
        %2289 = vmatmul.mubr.f32.gmra.mrb[0].mxu0 %v2067
        %v2290 = vpop.f32.mrb[0].mxu0
        %v2291 = vadd.f32 0.0, %v2290
        %v2292 = vpop.f32.mrb[0].mxu0
        %2293 = vdwg.mxu0
        %s2294 = sld [smem:[#allocation2]]
        %s2295 = sshra.s32 %s448, 7
        %s2296 = sand.u32 %s448, 127
        %s2297 = smul.addr %s2295, 8
        %s2298 = scalar_lea.vmem %s400, %s2297
        %v2299 = vld [vmem:[%s2298] sm:$0xff]
        %v2300 = vld [vmem:[%s2298 + $0x8] sm:$0xff]
        %v2301 = vld [vmem:[%s2298 + $0x10] sm:$0xff]
        %v2302 = vld [vmem:[%s2298 + $0x18] sm:$0xff]
        %v2303 = vld [vmem:[%s2298 + $0x20] sm:$0xff]
        %v2304 = vld [vmem:[%s2298 + $0x28] sm:$0xff]
        %v2305 = vld [vmem:[%s2298 + $0x30] sm:$0xff]
        %v2306 = vld [vmem:[%s2298 + $0x38] sm:$0xff]
        %2307 = vxpose.xlu0.b32.start [1/16] %v2136, 128
        %2308 = vxpose.xlu0.b32.cont [2/16] %v2141, 128
        %2309 = vxpose.xlu0.b32.cont [3/16] %v2146, 128
        %2310 = vxpose.xlu0.b32.cont [4/16] %v2151, 128
        %2311 = vxpose.xlu0.b32.cont [5/16] %v2156, 128
        %2312 = vxpose.xlu0.b32.cont [6/16] %v2161, 128
        %2313 = vxpose.xlu0.b32.cont [7/16] %v2166, 128
        %2314 = vxpose.xlu0.b32.cont [8/16] %v2171, 128
        %2315 = vxpose.xlu0.b32.cont [9/16] %v2176, 128
        %2316 = vxpose.xlu0.b32.cont [10/16] %v2181, 128
        %2317 = vxpose.xlu0.b32.cont [11/16] %v2186, 128
        %2318 = vxpose.xlu0.b32.cont [12/16] %v2191, 128
        %2319 = vxpose.xlu0.b32.cont [13/16] %v2196, 128
        %2320 = vxpose.xlu0.b32.cont [14/16] %v2201, 128
        %2321 = vxpose.xlu0.b32.cont [15/16] %v2206, 128
        %2322 = vxpose.xlu0.b32.end [16/16] %v2211, 128
        %v2323 = vpop.trf.xlu0
        %v2324 = vpop.trf.xlu0
        %v2325 = vpop.trf.xlu0
        %v2326 = vpop.trf.xlu0
        %v2327 = vpop.trf.xlu0
        %v2328 = vpop.trf.xlu0
        %v2329 = vpop.trf.xlu0
        %v2330 = vpop.trf.xlu0
        %v2331 = vpop.trf.xlu0
        %v2332 = vpop.trf.xlu0
        %v2333 = vpop.trf.xlu0
        %v2334 = vpop.trf.xlu0
        %v2335 = vpop.trf.xlu0
        %v2336 = vpop.trf.xlu0
        %v2337 = vpop.trf.xlu0
        %v2338 = vpop.trf.xlu0
        %2339 = vxpose.xlu0.b32.start [1/16] %v2216, 128
        %2340 = vxpose.xlu0.b32.cont [2/16] %v2221, 128
        %2341 = vxpose.xlu0.b32.cont [3/16] %v2226, 128
        %2342 = vxpose.xlu0.b32.cont [4/16] %v2231, 128
        %2343 = vxpose.xlu0.b32.cont [5/16] %v2236, 128
        %2344 = vxpose.xlu0.b32.cont [6/16] %v2241, 128
        %2345 = vxpose.xlu0.b32.cont [7/16] %v2246, 128
        %2346 = vxpose.xlu0.b32.cont [8/16] %v2251, 128
        %2347 = vxpose.xlu0.b32.cont [9/16] %v2256, 128
        %2348 = vxpose.xlu0.b32.cont [10/16] %v2261, 128
        %2349 = vxpose.xlu0.b32.cont [11/16] %v2266, 128
        %2350 = vxpose.xlu0.b32.cont [12/16] %v2271, 128
        %2351 = vxpose.xlu0.b32.cont [13/16] %v2276, 128
        %2352 = vxpose.xlu0.b32.cont [14/16] %v2281, 128
        %2353 = vxpose.xlu0.b32.cont [15/16] %v2286, 128
        %2354 = vxpose.xlu0.b32.end [16/16] %v2291, 128
        %v2355 = vpop.trf.xlu0
        %v2356 = vpop.trf.xlu0
        %v2357 = vpop.trf.xlu0
        %v2358 = vpop.trf.xlu0
        %v2359 = vpop.trf.xlu0
        %v2360 = vpop.trf.xlu0
        %v2361 = vpop.trf.xlu0
        %v2362 = vpop.trf.xlu0
        %v2363 = vpop.trf.xlu0
        %v2364 = vpop.trf.xlu0
        %v2365 = vpop.trf.xlu0
        %v2366 = vpop.trf.xlu0
        %v2367 = vpop.trf.xlu0
        %v2368 = vpop.trf.xlu0
        %v2369 = vpop.trf.xlu0
        %v2370 = vpop.trf.xlu0
        %v2371 = vstv %s2294
        %v2372 = vmul.f32 %v2371, %v2323
        %v2373 = vmul.f32 %v2371, %v2355
        %v2374 = vmul.f32 %v2371, %v2324
        %v2375 = vmul.f32 %v2371, %v2356
        %v2376 = vmul.f32 %v2371, %v2325
        %v2377 = vmul.f32 %v2371, %v2357
        %v2378 = vmul.f32 %v2371, %v2326
        %v2379 = vmul.f32 %v2371, %v2358
        %v2380 = vadd.f32 %v2372, %v2299
        %v2381 = vadd.f32 %v2373, %v2300
        %v2382 = vadd.f32 %v2374, %v2301
        %v2383 = vadd.f32 %v2375, %v2302
        %v2384 = vadd.f32 %v2376, %v2303
        %v2385 = vadd.f32 %v2377, %v2304
        %v2386 = vadd.f32 %v2378, %v2305
        %v2387 = vadd.f32 %v2379, %v2306
        %2388 = vst [vmem:[%s388] sm:$0xff] %v2380
        %2389 = vst [vmem:[%s388 + $0x8] sm:$0xff] %v2381
        %2390 = vst [vmem:[%s388 + $0x10] sm:$0xff] %v2382
        %2391 = vst [vmem:[%s388 + $0x18] sm:$0xff] %v2383
        %2392 = vst [vmem:[%s388 + $0x20] sm:$0xff] %v2384
        %2393 = vst [vmem:[%s388 + $0x28] sm:$0xff] %v2385
        %2394 = vst [vmem:[%s388 + $0x30] sm:$0xff] %v2386
        %2395 = vst [vmem:[%s388 + $0x38] sm:$0xff] %v2387
        %2396 = vst [vmem:[%s395] sm:$0xff] %v2005
        %2397 = vst [vmem:[%s395 + $0x8] sm:$0xff] %v2006
        %2398 = vst [vmem:[%s395 + $0x10] sm:$0xff] %v2007
        %2399 = vst [vmem:[%s395 + $0x18] sm:$0xff] %v2008
        %2400 = vst [vmem:[%s395 + $0x20] sm:$0xff] %v2009
        %2401 = vst [vmem:[%s395 + $0x28] sm:$0xff] %v2010
        %2402 = vst [vmem:[%s395 + $0x30] sm:$0xff] %v2011
        %2403 = vst [vmem:[%s395 + $0x38] sm:$0xff] %v2012
        %2404 = vst [vmem:[%s395 + $0x40] sm:$0xff] %v2013
        %2405 = vst [vmem:[%s395 + $0x48] sm:$0xff] %v2014
        %2406 = vst [vmem:[%s395 + $0x50] sm:$0xff] %v2015
        %2407 = vst [vmem:[%s395 + $0x58] sm:$0xff] %v2016
        %2408 = vst [vmem:[%s395 + $0x60] sm:$0xff] %v2017
        %2409 = vst [vmem:[%s395 + $0x68] sm:$0xff] %v2018
        %2410 = vst [vmem:[%s395 + $0x70] sm:$0xff] %v2019
        %2411 = vst [vmem:[%s395 + $0x78] sm:$0xff] %v2020
        %2412 = vst [vmem:[%s395 + $0x80] sm:$0xff] %v2021
        %2413 = vst [vmem:[%s395 + $0x88] sm:$0xff] %v2022
        %2414 = vst [vmem:[%s395 + $0x90] sm:$0xff] %v2023
        %2415 = vst [vmem:[%s395 + $0x98] sm:$0xff] %v2024
        %2416 = vst [vmem:[%s395 + $0xa0] sm:$0xff] %v2025
        %2417 = vst [vmem:[%s395 + $0xa8] sm:$0xff] %v2026
        %2418 = vst [vmem:[%s395 + $0xb0] sm:$0xff] %v2027
        %2419 = vst [vmem:[%s395 + $0xb8] sm:$0xff] %v2028
        %2420 = vst [vmem:[%s395 + $0xc0] sm:$0xff] %v2029
        %2421 = vst [vmem:[%s395 + $0xc8] sm:$0xff] %v2030
        %2422 = vst [vmem:[%s395 + $0xd0] sm:$0xff] %v2031
        %2423 = vst [vmem:[%s395 + $0xd8] sm:$0xff] %v2032
        %2424 = vst [vmem:[%s395 + $0xe0] sm:$0xff] %v2033
        %2425 = vst [vmem:[%s395 + $0xe8] sm:$0xff] %v2034
        %2426 = vst [vmem:[%s395 + $0xf0] sm:$0xff] %v2035
        %2427 = vst [vmem:[%s395 + $0xf8] sm:$0xff] %v2036
        %2428 = vst [vmem:[%s395 + $0x100] sm:$0xff] %v2037
        %2429 = vst [vmem:[%s395 + $0x108] sm:$0xff] %v2038
        %2430 = vst [vmem:[%s395 + $0x110] sm:$0xff] %v2039
        %2431 = vst [vmem:[%s395 + $0x118] sm:$0xff] %v2040
        %2432 = vst [vmem:[%s395 + $0x120] sm:$0xff] %v2041
        %2433 = vst [vmem:[%s395 + $0x128] sm:$0xff] %v2042
        %2434 = vst [vmem:[%s395 + $0x130] sm:$0xff] %v2043
        %2435 = vst [vmem:[%s395 + $0x138] sm:$0xff] %v2044
        %2436 = vst [vmem:[%s395 + $0x140] sm:$0xff] %v2045
        %2437 = vst [vmem:[%s395 + $0x148] sm:$0xff] %v2046
        %2438 = vst [vmem:[%s395 + $0x150] sm:$0xff] %v2047
        %2439 = vst [vmem:[%s395 + $0x158] sm:$0xff] %v2048
        %2440 = vst [vmem:[%s395 + $0x160] sm:$0xff] %v2049
        %2441 = vst [vmem:[%s395 + $0x168] sm:$0xff] %v2050
        %2442 = vst [vmem:[%s395 + $0x170] sm:$0xff] %v2051
        %2443 = vst [vmem:[%s395 + $0x178] sm:$0xff] %v2052
        %2444 = vst [vmem:[%s395 + $0x180] sm:$0xff] %v2053
        %2445 = vst [vmem:[%s395 + $0x188] sm:$0xff] %v2054
        %2446 = vst [vmem:[%s395 + $0x190] sm:$0xff] %v2055
        %2447 = vst [vmem:[%s395 + $0x198] sm:$0xff] %v2056
        %2448 = vst [vmem:[%s395 + $0x1a0] sm:$0xff] %v2057
        %2449 = vst [vmem:[%s395 + $0x1a8] sm:$0xff] %v2058
        %2450 = vst [vmem:[%s395 + $0x1b0] sm:$0xff] %v2059
        %2451 = vst [vmem:[%s395 + $0x1b8] sm:$0xff] %v2060
        %2452 = vst [vmem:[%s395 + $0x1c0] sm:$0xff] %v2061
        %2453 = vst [vmem:[%s395 + $0x1c8] sm:$0xff] %v2062
        %2454 = vst [vmem:[%s395 + $0x1d0] sm:$0xff] %v2063
        %2455 = vst [vmem:[%s395 + $0x1d8] sm:$0xff] %v2064
        %2456 = vst [vmem:[%s395 + $0x1e0] sm:$0xff] %v2065
        %2457 = vst [vmem:[%s395 + $0x1e8] sm:$0xff] %v2066
        %2458 = vst [vmem:[%s395 + $0x1f0] sm:$0xff] %v2067
        %2459 = vst [vmem:[%s395 + $0x1f8] sm:$0xff] %v2068
        %s2460 = sand.u32 %s250, 1
        %s2461 = scalar_lea.sflag [#allocation4], %s2460
        %s2462 = sand.u32 %s250, 1
        %s2463 = smul.addr %s2462, 64
        %s2464 = scalar_lea.vmem [#allocation3], %s2463
        %s2465 = sand.u32 %s278, 1
        %s2466 = scalar_lea.sflag [#allocation6], %s2465
        %s2467 = sand.u32 %s278, 1
        %s2468 = smul.addr %s2467, 512
        %s2469 = scalar_lea.vmem [#allocation5], %s2468
        // Predicated region
        $region57: #{tpu_custom_call.1} parent=55 // pred_check
          %p2470 = pneg %p260
        $region58: #{tpu_custom_call.1} parent=55 // pred_check_branch
          %2472 = sbr.rel (%p2470) target = $region60
        $region59: #{tpu_custom_call.1} parent=55 // pred_region
          %s2473 = smul.u32 2, %s34
          %s2475 = ssub.s32 1024, 1024
          %2476 = vsyncadd %s2461, %s2475
          %s2477 = smul.addr %s33, 8
          %s2478 = sadd.s32 %s2473, %s2477
          %s2479 = smul.addr %s2478, 128
          %s2480 = scalar_lea.hbm %s9, %s2479
          %s2481 = sshll.u32 %s2464, 4
          %s2482 = int_to_ptr.vmem [resolvable:$true] %s2481
          %2487 = dma.vmem_to_hbm [thread:$0]  %s2482, 1024, %s2480, %s2461, 256, 256, 16
        $region60: #{tpu_custom_call.1} parent=55 // pred_fallthru
          _
        // Predicated region
        $region61: #{tpu_custom_call.1} parent=55 // pred_check
          %p2488 = pneg %p288
        $region62: #{tpu_custom_call.1} parent=55 // pred_check_branch
          %2490 = sbr.rel (%p2488) target = $region64
        $region63: #{tpu_custom_call.1} parent=55 // pred_region
          %s2491 = smul.u32 32, %s34
          %s2493 = ssub.s32 8192, 8192
          %2494 = vsyncadd %s2466, %s2493
          %s2495 = smul.addr %s2491, 2
          %s2496 = smul.addr %s33, 64
          %s2497 = sadd.s32 %s2495, %s2496
          %s2498 = smul.addr %s2497, 128
          %s2499 = scalar_lea.hbm %s10, %s2498
          %s2500 = sshll.u32 %s2469, 4
          %s2501 = int_to_ptr.vmem [resolvable:$true] %s2500
          %2506 = dma.vmem_to_hbm [thread:$0]  %s2501, 8192, %s2499, %s2466, 256, 256, 16
        $region64: #{tpu_custom_call.1} parent=55 // pred_fallthru
          _
      $region56: #{tpu_custom_call.1} parent=5 // pred_fallthru
        _
      %p2507 = scmp.le.s32.totalorder 2, %s24
      // Predicated region
      $region65: #{tpu_custom_call.1} parent=5 // pred_check
        %p2508 = pneg %p2507
      $region66: #{tpu_custom_call.1} parent=5 // pred_check_branch
        %2510 = sbr.rel (%p2508) target = $region68
      $region67: #{tpu_custom_call.1} parent=5 // pred_region
        %s2511 = ssub.s32 %s24, 2
        // Predicated region
        $region69: #{tpu_custom_call.1} parent=67 // pred_check
          %p2512 = pneg %p266
        $region70: #{tpu_custom_call.1} parent=67 // pred_check_branch
          %2514 = sbr.rel (%p2512) target = $region72
        $region71: #{tpu_custom_call.1} parent=67 // pred_region
          %s2515 = sand.u32 %s251, 1
          %s2516 = scalar_lea.sflag [#allocation4], %s2515
          %s2517 = sand.u32 %s251, 1
          %s2518 = smul.addr %s2517, 64
          %s2519 = scalar_lea.vmem [#allocation3], %s2518
          %2520 = dma.done %s2516, 1024
        $region72: #{tpu_custom_call.1} parent=67 // pred_fallthru
          _
        // Predicated region
        $region73: #{tpu_custom_call.1} parent=67 // pred_check
          %p2521 = pneg %p294
        $region74: #{tpu_custom_call.1} parent=67 // pred_check_branch
          %2523 = sbr.rel (%p2521) target = $region76
        $region75: #{tpu_custom_call.1} parent=67 // pred_region
          %s2524 = sand.u32 %s279, 1
          %s2525 = scalar_lea.sflag [#allocation6], %s2524
          %s2526 = sand.u32 %s279, 1
          %s2527 = smul.addr %s2526, 512
          %s2528 = scalar_lea.vmem [#allocation5], %s2527
          %2529 = dma.done %s2525, 8192
        $region76: #{tpu_custom_call.1} parent=67 // pred_fallthru
          _
      $region68: #{tpu_custom_call.1} parent=5 // pred_fallthru
        _
    $region6: #{tpu_custom_call.1} parent=1 // loop_footer
      %s28 = sadd.s32 1, %s24
    $region7: #{tpu_custom_call.1} parent=1 // loop_footer_branch
      %23 = sbr.rel target = $region3
    $region8: #{tpu_custom_call.1} parent=1 // loop_exit
      _
    %2530 = vsyncpa [#allocation4], 1
    %s2531 = scalar_lea.sflag [#allocation4], 1
    %2532 = vsyncpa %s2531, 1
    %2533 = vsyncpa [#allocation6], 1
    %s2534 = scalar_lea.sflag [#allocation6], 1
    %2535 = vsyncpa %s2534, 1

</llo_original>
